<compile_context>
chip_gen: v7x
topology: tpu7x:2x2x1
jax: 0.10.0
libtpu: 0.0.40
codegen_flags: <defaults>
</compile_context>

<pallas_src>
import jax
import jax.numpy as jnp
from jax.experimental import pallas as pl
from jax.experimental.pallas import tpu as pltpu


def _upsample_matrix(n_in: int, n_out: int) -> jnp.ndarray:
    """Row-interpolation matrix A (n_out, n_in) for bilinear, align_corners=True."""
    i = jnp.arange(n_out, dtype=jnp.float32)
    src = i * (n_in - 1) / (n_out - 1)
    lo = jnp.clip(jnp.floor(src).astype(jnp.int32), 0, n_in - 2)
    frac = src - lo.astype(jnp.float32)
    rows = jnp.arange(n_out)
    A = jnp.zeros((n_out, n_in), jnp.float32)
    A = A.at[rows, lo].add(1.0 - frac)
    A = A.at[rows, lo + 1].add(frac)
    return A


def _banded_conv_weights(w_hwio: jnp.ndarray, W2: int) -> jnp.ndarray:
    """(3,3,Cin,Cout) -> (3, (W2+2)*Cin, W2*Cout) block-banded matrices B_dh with
    B_dh[(w2+dw)*Cin+ci, w2*Cout+co] = w[dh,dw,ci,co], so that the whole 3x3 conv is
    out = sum_dh xp_rows(dh) @ B_dh, with xp the zero-padded upsample in
    (H2+2, (W2+2)*Cin) lane-dense layout."""
    _, _, Cin, Cout = w_hwio.shape
    Wp = W2 + 2
    k = jnp.arange(Wp * Cin)
    j = jnp.arange(W2 * Cout)
    w_idx, ci_idx = k // Cin, k % Cin
    w2_idx, co_idx = j // Cout, j % Cout
    dw = w_idx[:, None] - w2_idx[None, :]                    # (Wp*Cin, W2*Cout)
    valid = (dw >= 0) & (dw <= 2)
    vals = w_hwio[:, jnp.clip(dw, 0, 2), ci_idx[:, None], co_idx[None, :]]
    return jnp.where(valid[None], vals, 0.0)                 # (3, Wp*Cin, W2*Cout)


def _upsample_conv_kernel(x_ref, ah_ref, bw_ref, b_ref, conv_ref, stats_ref, xp_ref):
    """One batch element per grid step (grid over N, 'parallel').

    x_ref    : (1, H, W*Cin)            input, W*Cin folded onto the lane axis
    ah_ref   : (H2, H)                  bilinear row-upsample matrix
    bw_ref   : (W*Cin, (W2+2)*Cin)      column-upsample kron(Aw^T, I_Cin) with W zero-pad folded in
    b_ref    : (3, (W2+2)*Cin, W2*Cout) block-banded 3x3 conv weights (bf16)
    conv_ref : (1, H2, W2*Cout)         conv output slab (pre-BN, f32, lane-dense)
    stats_ref: (1, 2, W2*Cout)          per-lane [sum, sum-of-squares] over H2 (for BN)
    xp_ref   : (H2+2, (W2+2)*Cin)       zero-padded upsample scratch (f32)
    """
    H2 = xp_ref.shape[0] - 2

    # --- separable bilinear upsample (align_corners=True): two small f32 matmuls ---
    uh = jnp.dot(ah_ref[...], x_ref[0], preferred_element_type=jnp.float32)   # (H2, W*Cin)
    up = jnp.dot(uh, bw_ref[...], preferred_element_type=jnp.float32)         # (H2, (W2+2)*Cin); W-pad lanes already 0

    # H zero-padding rows are rewritten every step so per-core scratch under
    # "parallel" (megacore) semantics is always valid.
    zrow = jnp.zeros((1, xp_ref.shape[1]), xp_ref.dtype)
    xp_ref[0:1, :] = zrow
    xp_ref[H2 + 1:H2 + 2, :] = zrow
    xp_ref[1:H2 + 1, :] = up

    # --- 3x3 conv as 3 fat matmuls; bf16 operands, f32 accumulation ---
    acc = jnp.zeros(conv_ref.shape[1:], jnp.float32)           # (H2, W2*Cout) ~ 8 vregs, no spill
    for dh in range(3):
        lhs = xp_ref[dh:dh + H2, :].astype(jnp.bfloat16)
        acc = acc + jnp.dot(lhs, b_ref[dh], preferred_element_type=jnp.float32)

    conv_ref[0] = acc
    stats_ref[0] = jnp.concatenate(
        [jnp.sum(acc, axis=0, keepdims=True),
         jnp.sum(acc * acc, axis=0, keepdims=True)], axis=0)


def _bn_relu_kernel(conv_ref, scale_ref, shift_ref, o_ref):
    """Fused BatchNorm(affine) + ReLU epilogue; conv slab aliased to the output (in place)."""
    o_ref[0] = jnp.maximum(conv_ref[0] * scale_ref[...] + shift_ref[...], 0.0)


@jax.jit
def up_conv_forward(x_nchw, w_hwio, gamma, beta):
    """x_nchw: (N, Cin, H, W) -> (N, Cout, 2H, 2W), matching the PyTorch module."""
    N, Cin, H, W = x_nchw.shape
    Cout = w_hwio.shape[-1]
    H2, W2 = 2 * H, 2 * W
    eps = 1e-5

    # ---- layout plumbing + weight repacking (XLA side, done once per call) ----
    x_l = jnp.transpose(x_nchw, (0, 2, 3, 1)).reshape(N, H, W * Cin).astype(jnp.float32)
    Ah = _upsample_matrix(H, H2)                                  # (H2, H)
    Aw = _upsample_matrix(W, W2)                                  # (W2, W)
    bw = jnp.zeros((W * Cin, (W2 + 2) * Cin), jnp.float32)
    bw = bw.at[:, Cin:(W2 + 1) * Cin].set(jnp.kron(Aw.T, jnp.eye(Cin, dtype=jnp.float32)))
    b_conv = _banded_conv_weights(w_hwio.astype(jnp.float32), W2).astype(jnp.bfloat16)

    # ---- stage 1: upsample + conv + BN partial stats (one batch element per program) ----
    conv_slab, stats = pl.pallas_call(
        _upsample_conv_kernel,
        grid=(N,),
        in_specs=[
            pl.BlockSpec((1, H, W * Cin), lambda n: (n, 0, 0)),
            pl.BlockSpec((H2, H), lambda n: (0, 0)),
            pl.BlockSpec((W * Cin, (W2 + 2) * Cin), lambda n: (0, 0)),
            pl.BlockSpec((3, (W2 + 2) * Cin, W2 * Cout), lambda n: (0, 0, 0)),
        ],
        out_specs=(
            pl.BlockSpec((1, H2, W2 * Cout), lambda n: (n, 0, 0)),
            pl.BlockSpec((1, 2, W2 * Cout), lambda n: (n, 0, 0)),
        ),
        out_shape=(
            jax.ShapeDtypeStruct((N, H2, W2 * Cout), jnp.float32),
            jax.ShapeDtypeStruct((N, 2, W2 * Cout), jnp.float32),
        ),
        scratch_shapes=[pltpu.VMEM((H2 + 2, (W2 + 2) * Cin), jnp.float32)],
        compiler_params=pltpu.CompilerParams(dimension_semantics=("parallel",)),
    )(x_l, Ah, bw, b_conv)

    # ---- BatchNorm finalisation: O(Cout) scalar math from the streamed sum/sumsq ----
    s = jnp.sum(stats[:, 0, :], axis=0).reshape(W2, Cout).sum(axis=0)     # (Cout,)
    sq = jnp.sum(stats[:, 1, :], axis=0).reshape(W2, Cout).sum(axis=0)    # (Cout,)
    cnt = N * H2 * W2
    mean = s / cnt
    var = sq / cnt - mean * mean                                          # biased (training-mode BN)
    scale_c = gamma.astype(jnp.float32) * jax.lax.rsqrt(var + eps)
    shift_c = beta.astype(jnp.float32) - mean * scale_c
    scale_l = jnp.tile(scale_c, W2).reshape(1, W2 * Cout)                 # per-lane (w2-major, cout-minor)
    shift_l = jnp.tile(shift_c, W2).reshape(1, W2 * Cout)

    # ---- stage 2: fused normalize + ReLU, in place over the conv slab ----
    y = pl.pallas_call(
        _bn_relu_kernel,
        grid=(N,),
        in_specs=[
            pl.BlockSpec((1, H2, W2 * Cout), lambda n: (n, 0, 0)),
            pl.BlockSpec((1, W2 * Cout), lambda n: (0, 0)),
            pl.BlockSpec((1, W2 * Cout), lambda n: (0, 0)),
        ],
        out_specs=pl.BlockSpec((1, H2, W2 * Cout), lambda n: (n, 0, 0)),
        out_shape=jax.ShapeDtypeStruct((N, H2, W2 * Cout), jnp.float32),
        input_output_aliases={0: 0},
        compiler_params=pltpu.CompilerParams(dimension_semantics=("parallel",)),
    )(conv_slab, scale_l, shift_l)

    # lane-dense slab -> NCHW (XLA layout plumbing)
    return jnp.transpose(y.reshape(N, H2, W2, Cout), (0, 3, 1, 2))


def _reference_forward(x_nchw, w_hwio, gamma, beta, Ah, Aw):
    """Plain-JAX reference implementing the same math (for correctness check)."""
    x = jnp.transpose(x_nchw, (0, 2, 3, 1))                               # NHWC
    up = jnp.einsum('oh,nhwc->nowc', Ah, x)
    up = jnp.einsum('pw,nowc->nopc', Aw, up)
    conv = jax.lax.conv_general_dilated(
        up, w_hwio, window_strides=(1, 1), padding=((1, 1), (1, 1)),
        dimension_numbers=('NHWC', 'HWIO', 'NHWC'),
        precision=jax.lax.Precision.HIGHEST)
    mean = conv.mean(axis=(0, 1, 2), keepdims=True)
    var = ((conv - mean) ** 2).mean(axis=(0, 1, 2), keepdims=True)
    y = (conv - mean) * jax.lax.rsqrt(var + 1e-5) * gamma + beta
    y = jnp.maximum(y, 0.0)
    return jnp.transpose(y, (0, 3, 1, 2))


if __name__ == "__main__":
    # Small shapes consistent with the module: N=2, ch_in=4, ch_out=8, 16x16 spatial.
    N, Cin, Cout, H, W = 2, 4, 8, 16, 16
    H2, W2 = 2 * H, 2 * W

    key = jax.random.PRNGKey(0)
    kx, kw = jax.random.split(key)

    x = jax.random.normal(kx, (N, Cin, H, W), dtype=jnp.float32)

    # Conv2d weight: kaiming_normal_, mode='fan_out', nonlinearity='relu' (HWIO).
    fan_out = Cout * 3 * 3
    w_hwio = jax.random.normal(kw, (3, 3, Cin, Cout), dtype=jnp.float32) * jnp.sqrt(2.0 / fan_out)

    # BatchNorm2d params per module init: weight=1, bias=0.
    gamma = jnp.ones((Cout,), jnp.float32)
    beta = jnp.zeros((Cout,), jnp.float32)

    out = up_conv_forward(x, w_hwio, gamma, beta)
    out = jax.block_until_ready(out)
    assert out.shape == (N, Cout, H2, W2), out.shape

    Ah = _upsample_matrix(H, H2)
    Aw = _upsample_matrix(W, W2)
    ref = _reference_forward(x, w_hwio, gamma, beta, Ah, Aw)
    max_err = float(jnp.max(jnp.abs(out - ref)))
    # Tolerance accounts for bf16 conv-matmul operands (f32 accumulation).
    assert jnp.allclose(out, ref, atol=2e-2, rtol=2e-2), max_err

    print("KERNEL_OK")
</pallas_src>

<mosaic_0001>
module attributes {stable_mosaic.version = 11 : i64} {
  func.func private @main(%arg0: i32) attributes {dimension_semantics = [#tpu.dimension_semantics<core_parallel>], iteration_bounds = array<i64: 2>, tpu.core_type = #tpu.core_type<sc_scalar_subcore>, window_params = []} {
    return
  }
}

module attributes {stable_mosaic.version = 11 : i64} {
  func.func private @main(%arg0: i32) attributes {dimension_semantics = [#tpu.dimension_semantics<core_parallel>], iteration_bounds = array<i64: 2>, tpu.core_type = #tpu.core_type<sc_scalar_subcore>, window_params = []} {
    return
  }
}

module attributes {stable_mosaic.version = 11 : i64} {
  func.func @_upsample_conv_kernel(%arg0: i32, %arg1: memref<1x16x64xf32, #tpu.memory_space<vmem>>, %arg2: memref<32x16xf32, #tpu.memory_space<vmem>>, %arg3: memref<64x136xf32, #tpu.memory_space<vmem>>, %arg4: memref<3x136x256xbf16, #tpu.memory_space<vmem>>, %arg5: memref<1x32x256xf32, #tpu.memory_space<vmem>>, %arg6: memref<1x2x256xf32, #tpu.memory_space<vmem>>, %arg7: memref<34x136xf32, #tpu.memory_space<vmem>>) attributes {dimension_semantics = [#tpu.dimension_semantics<parallel>], iteration_bounds = array<i64: 2>, scalar_prefetch = 0 : i64, scratch_operands = 1 : i64, tpu.core_type = #tpu.core_type<tc>, window_params = [{transform_indices = @transform_0, window_bounds = array<i64: 1, 16, 64>}, {pipeline_mode = #tpu.pipeline_mode<synchronous>, transform_indices = @transform_1, window_bounds = array<i64: 32, 16>}, {pipeline_mode = #tpu.pipeline_mode<synchronous>, transform_indices = @transform_2, window_bounds = array<i64: 64, 136>}, {pipeline_mode = #tpu.pipeline_mode<synchronous>, transform_indices = @transform_3, window_bounds = array<i64: 3, 136, 256>}, {transform_indices = @transform_4, window_bounds = array<i64: 1, 32, 256>}, {transform_indices = @transform_5, window_bounds = array<i64: 1, 2, 256>}]} {
    %c0 = arith.constant 0 : index
    %c0_0 = arith.constant 0 : index
    %0 = vector.load %arg2[%c0, %c0_0] : memref<32x16xf32, #tpu.memory_space<vmem>>, vector<32x16xf32>
    %c0_1 = arith.constant 0 : index
    %c0_2 = arith.constant 0 : index
    %c0_3 = arith.constant 0 : index
    %1 = vector.load %arg1[%c0_1, %c0_2, %c0_3] : memref<1x16x64xf32, #tpu.memory_space<vmem>>, vector<1x16x64xf32>
    %2 = vector.shape_cast %1 : vector<1x16x64xf32> to vector<16x64xf32>
    %cst = arith.constant dense<0.000000e+00> : vector<32x64xf32>
    %3 = tpu.matmul %0, %2, %cst {dimension_numbers = #tpu.dot_dimension_numbers<[1], [0], [0], [1], [0, 0, 1, 1], [], []>} : vector<32x16xf32>, vector<16x64xf32>, vector<32x64xf32> -> vector<32x64xf32>
    %c0_4 = arith.constant 0 : index
    %c0_5 = arith.constant 0 : index
    %4 = vector.load %arg3[%c0_4, %c0_5] : memref<64x136xf32, #tpu.memory_space<vmem>>, vector<64x136xf32>
    %cst_6 = arith.constant dense<0.000000e+00> : vector<32x136xf32>
    %5 = tpu.matmul %3, %4, %cst_6 {dimension_numbers = #tpu.dot_dimension_numbers<[1], [0], [0], [1], [0, 0, 1, 1], [], []>} : vector<32x64xf32>, vector<64x136xf32>, vector<32x136xf32> -> vector<32x136xf32>
    %cst_7 = arith.constant 0.000000e+00 : f32
    %6 = vector.broadcast %cst_7 : f32 to vector<1x136xf32>
    %c0_8 = arith.constant 0 : index
    %c0_9 = arith.constant 0 : index
    %7 = vector.load %arg7[%c0_8, %c0_9] : memref<34x136xf32, #tpu.memory_space<vmem>>, vector<1x136xf32>
    tpu.vector_store %arg7[%c0_8, %c0_9], %6 {strides = array<i32>} : memref<34x136xf32, #tpu.memory_space<vmem>>, vector<1x136xf32>,
    %c33 = arith.constant 33 : index
    %c0_10 = arith.constant 0 : index
    %8 = vector.load %arg7[%c33, %c0_10] : memref<34x136xf32, #tpu.memory_space<vmem>>, vector<1x136xf32>
    tpu.vector_store %arg7[%c33, %c0_10], %6 {strides = array<i32>} : memref<34x136xf32, #tpu.memory_space<vmem>>, vector<1x136xf32>,
    %c1 = arith.constant 1 : index
    %c0_11 = arith.constant 0 : index
    %9 = vector.load %arg7[%c1, %c0_11] : memref<34x136xf32, #tpu.memory_space<vmem>>, vector<32x136xf32>
    tpu.vector_store %arg7[%c1, %c0_11], %5 {strides = array<i32>} : memref<34x136xf32, #tpu.memory_space<vmem>>, vector<32x136xf32>,
    %cst_12 = arith.constant 0.000000e+00 : f32
    %10 = vector.broadcast %cst_12 : f32 to vector<32x256xf32>
    %c0_13 = arith.constant 0 : index
    %c0_14 = arith.constant 0 : index
    %11 = vector.load %arg7[%c0_13, %c0_14] : memref<34x136xf32, #tpu.memory_space<vmem>>, vector<32x136xf32>
    %12 = arith.truncf %11 : vector<32x136xf32> to vector<32x136xbf16>
    %c0_15 = arith.constant 0 : index
    %c0_16 = arith.constant 0 : index
    %c0_17 = arith.constant 0 : index
    %13 = vector.load %arg4[%c0_15, %c0_16, %c0_17] : memref<3x136x256xbf16, #tpu.memory_space<vmem>>, vector<1x136x256xbf16>
    %14 = vector.shape_cast %13 : vector<1x136x256xbf16> to vector<136x256xbf16>
    %cst_18 = arith.constant dense<0.000000e+00> : vector<32x256xf32>
    %15 = tpu.matmul %12, %14, %cst_18 {dimension_numbers = #tpu.dot_dimension_numbers<[1], [0], [0], [1], [0, 0, 1, 1], [], []>} : vector<32x136xbf16>, vector<136x256xbf16>, vector<32x256xf32> -> vector<32x256xf32>
    %16 = arith.addf %10, %15 : vector<32x256xf32>
    %c1_19 = arith.constant 1 : index
    %c0_20 = arith.constant 0 : index
    %17 = vector.load %arg7[%c1_19, %c0_20] : memref<34x136xf32, #tpu.memory_space<vmem>>, vector<32x136xf32>
    %18 = arith.truncf %17 : vector<32x136xf32> to vector<32x136xbf16>
    %c1_21 = arith.constant 1 : index
    %c0_22 = arith.constant 0 : index
    %c0_23 = arith.constant 0 : index
    %19 = vector.load %arg4[%c1_21, %c0_22, %c0_23] : memref<3x136x256xbf16, #tpu.memory_space<vmem>>, vector<1x136x256xbf16>
    %20 = vector.shape_cast %19 : vector<1x136x256xbf16> to vector<136x256xbf16>
    %cst_24 = arith.constant dense<0.000000e+00> : vector<32x256xf32>
    %21 = tpu.matmul %18, %20, %cst_24 {dimension_numbers = #tpu.dot_dimension_numbers<[1], [0], [0], [1], [0, 0, 1, 1], [], []>} : vector<32x136xbf16>, vector<136x256xbf16>, vector<32x256xf32> -> vector<32x256xf32>
    %22 = arith.addf %16, %21 : vector<32x256xf32>
    %c2 = arith.constant 2 : index
    %c0_25 = arith.constant 0 : index
    %23 = vector.load %arg7[%c2, %c0_25] : memref<34x136xf32, #tpu.memory_space<vmem>>, vector<32x136xf32>
    %24 = arith.truncf %23 : vector<32x136xf32> to vector<32x136xbf16>
    %c2_26 = arith.constant 2 : index
    %c0_27 = arith.constant 0 : index
    %c0_28 = arith.constant 0 : index
    %25 = vector.load %arg4[%c2_26, %c0_27, %c0_28] : memref<3x136x256xbf16, #tpu.memory_space<vmem>>, vector<1x136x256xbf16>
    %26 = vector.shape_cast %25 : vector<1x136x256xbf16> to vector<136x256xbf16>
    %cst_29 = arith.constant dense<0.000000e+00> : vector<32x256xf32>
    %27 = tpu.matmul %24, %26, %cst_29 {dimension_numbers = #tpu.dot_dimension_numbers<[1], [0], [0], [1], [0, 0, 1, 1], [], []>} : vector<32x136xbf16>, vector<136x256xbf16>, vector<32x256xf32> -> vector<32x256xf32>
    %28 = arith.addf %22, %27 : vector<32x256xf32>
    %c0_30 = arith.constant 0 : index
    %c0_31 = arith.constant 0 : index
    %c0_32 = arith.constant 0 : index
    %29 = vector.load %arg5[%c0_30, %c0_31, %c0_32] : memref<1x32x256xf32, #tpu.memory_space<vmem>>, vector<1x32x256xf32>
    %30 = vector.shape_cast %29 : vector<1x32x256xf32> to vector<32x256xf32>
    %31 = vector.shape_cast %28 : vector<32x256xf32> to vector<1x32x256xf32>
    tpu.vector_store %arg5[%c0_30, %c0_31, %c0_32], %31 {strides = array<i32>} : memref<1x32x256xf32, #tpu.memory_space<vmem>>, vector<1x32x256xf32>,
    %cst_33 = arith.constant dense<0.000000e+00> : vector<256xf32>
    %32 = vector.multi_reduction <add>, %28, %cst_33 [0] : vector<32x256xf32> to vector<256xf32>
    %33 = vector.shape_cast %32 : vector<256xf32> to vector<1x256xf32>
    %34 = arith.mulf %28, %28 : vector<32x256xf32>
    %cst_34 = arith.constant dense<0.000000e+00> : vector<256xf32>
    %35 = vector.multi_reduction <add>, %34, %cst_34 [0] : vector<32x256xf32> to vector<256xf32>
    %36 = vector.shape_cast %35 : vector<256xf32> to vector<1x256xf32>
    %37 = tpu.concatenate %33, %36 in 0 : vector<1x256xf32>, vector<1x256xf32> -> vector<2x256xf32>
    %c0_35 = arith.constant 0 : index
    %c0_36 = arith.constant 0 : index
    %c0_37 = arith.constant 0 : index
    %38 = vector.load %arg6[%c0_35, %c0_36, %c0_37] : memref<1x2x256xf32, #tpu.memory_space<vmem>>, vector<1x2x256xf32>
    %39 = vector.shape_cast %38 : vector<1x2x256xf32> to vector<2x256xf32>
    %40 = vector.shape_cast %37 : vector<2x256xf32> to vector<1x2x256xf32>
    tpu.vector_store %arg6[%c0_35, %c0_36, %c0_37], %40 {strides = array<i32>} : memref<1x2x256xf32, #tpu.memory_space<vmem>>, vector<1x2x256xf32>,
    return
  }
  func.func @transform_0(%arg0: i32) -> (i32, i32, i32) {
    %c0_i32 = arith.constant 0 : i32
    %c0_i32_0 = arith.constant 0 : i32
    %c0_i32_1 = arith.constant 0 : i32
    return %arg0, %c0_i32, %c0_i32_0 : i32, i32, i32
  }
  func.func @transform_1(%arg0: i32) -> (i32, i32) {
    %c0_i32 = arith.constant 0 : i32
    %c0_i32_0 = arith.constant 0 : i32
    %c0_i32_1 = arith.constant 0 : i32
    return %c0_i32, %c0_i32_0 : i32, i32
  }
  func.func @transform_2(%arg0: i32) -> (i32, i32) {
    %c0_i32 = arith.constant 0 : i32
    %c0_i32_0 = arith.constant 0 : i32
    %c0_i32_1 = arith.constant 0 : i32
    return %c0_i32, %c0_i32_0 : i32, i32
  }
  func.func @transform_3(%arg0: i32) -> (i32, i32, i32) {
    %c0_i32 = arith.constant 0 : i32
    %c0_i32_0 = arith.constant 0 : i32
    %c0_i32_1 = arith.constant 0 : i32
    %c0_i32_2 = arith.constant 0 : i32
    return %c0_i32, %c0_i32_0, %c0_i32_1 : i32, i32, i32
  }
  func.func @transform_4(%arg0: i32) -> (i32, i32, i32) {
    %c0_i32 = arith.constant 0 : i32
    %c0_i32_0 = arith.constant 0 : i32
    %c0_i32_1 = arith.constant 0 : i32
    return %arg0, %c0_i32, %c0_i32_0 : i32, i32, i32
  }
  func.func @transform_5(%arg0: i32) -> (i32, i32, i32) {
    %c0_i32 = arith.constant 0 : i32
    %c0_i32_0 = arith.constant 0 : i32
    %c0_i32_1 = arith.constant 0 : i32
    return %arg0, %c0_i32, %c0_i32_0 : i32, i32, i32
  }
}

module attributes {stable_mosaic.version = 11 : i64} {
  func.func @_bn_relu_kernel(%arg0: i32, %arg1: memref<1x32x256xf32, #tpu.memory_space<vmem>>, %arg2: memref<1x256xf32, #tpu.memory_space<vmem>>, %arg3: memref<1x256xf32, #tpu.memory_space<vmem>>, %arg4: memref<1x32x256xf32, #tpu.memory_space<vmem>>) attributes {dimension_semantics = [#tpu.dimension_semantics<parallel>], iteration_bounds = array<i64: 2>, scalar_prefetch = 0 : i64, scratch_operands = 0 : i64, tpu.core_type = #tpu.core_type<tc>, window_params = [{transform_indices = @transform_0, window_bounds = array<i64: 1, 32, 256>}, {pipeline_mode = #tpu.pipeline_mode<synchronous>, transform_indices = @transform_1, window_bounds = array<i64: 1, 256>}, {pipeline_mode = #tpu.pipeline_mode<synchronous>, transform_indices = @transform_2, window_bounds = array<i64: 1, 256>}, {transform_indices = @transform_3, window_bounds = array<i64: 1, 32, 256>}]} {
    %c0 = arith.constant 0 : index
    %c0_0 = arith.constant 0 : index
    %c0_1 = arith.constant 0 : index
    %0 = vector.load %arg1[%c0, %c0_0, %c0_1] : memref<1x32x256xf32, #tpu.memory_space<vmem>>, vector<1x32x256xf32>
    %1 = vector.shape_cast %0 : vector<1x32x256xf32> to vector<32x256xf32>
    %c0_2 = arith.constant 0 : index
    %c0_3 = arith.constant 0 : index
    %2 = vector.load %arg2[%c0_2, %c0_3] : memref<1x256xf32, #tpu.memory_space<vmem>>, vector<1x256xf32>
    %3 = vector.broadcast %2 : vector<1x256xf32> to vector<32x256xf32>
    %4 = arith.mulf %1, %3 : vector<32x256xf32>
    %c0_4 = arith.constant 0 : index
    %c0_5 = arith.constant 0 : index
    %5 = vector.load %arg3[%c0_4, %c0_5] : memref<1x256xf32, #tpu.memory_space<vmem>>, vector<1x256xf32>
    %6 = vector.broadcast %5 : vector<1x256xf32> to vector<32x256xf32>
    %7 = arith.addf %4, %6 : vector<32x256xf32>
    %cst = arith.constant 0.000000e+00 : f32
    %8 = vector.broadcast %cst : f32 to vector<32x256xf32>
    %9 = arith.maximumf %7, %8 : vector<32x256xf32>
    %c0_6 = arith.constant 0 : index
    %c0_7 = arith.constant 0 : index
    %c0_8 = arith.constant 0 : index
    %10 = vector.load %arg4[%c0_6, %c0_7, %c0_8] : memref<1x32x256xf32, #tpu.memory_space<vmem>>, vector<1x32x256xf32>
    %11 = vector.shape_cast %10 : vector<1x32x256xf32> to vector<32x256xf32>
    %12 = vector.shape_cast %9 : vector<32x256xf32> to vector<1x32x256xf32>
    tpu.vector_store %arg4[%c0_6, %c0_7, %c0_8], %12 {strides = array<i32>} : memref<1x32x256xf32, #tpu.memory_space<vmem>>, vector<1x32x256xf32>,
    return
  }
  func.func @transform_0(%arg0: i32) -> (i32, i32, i32) {
    %c0_i32 = arith.constant 0 : i32
    %c0_i32_0 = arith.constant 0 : i32
    %c0_i32_1 = arith.constant 0 : i32
    return %arg0, %c0_i32, %c0_i32_0 : i32, i32, i32
  }
  func.func @transform_1(%arg0: i32) -> (i32, i32) {
    %c0_i32 = arith.constant 0 : i32
    %c0_i32_0 = arith.constant 0 : i32
    %c0_i32_1 = arith.constant 0 : i32
    return %c0_i32, %c0_i32_0 : i32, i32
  }
  func.func @transform_2(%arg0: i32) -> (i32, i32) {
    %c0_i32 = arith.constant 0 : i32
    %c0_i32_0 = arith.constant 0 : i32
    %c0_i32_1 = arith.constant 0 : i32
    return %c0_i32, %c0_i32_0 : i32, i32
  }
  func.func @transform_3(%arg0: i32) -> (i32, i32, i32) {
    %c0_i32 = arith.constant 0 : i32
    %c0_i32_0 = arith.constant 0 : i32
    %c0_i32_1 = arith.constant 0 : i32
    return %arg0, %c0_i32, %c0_i32_0 : i32, i32, i32
  }
}

</mosaic_0001>

<llo_original>
// kernel: tile.13
$region0: #{tile.13}
  #allocation0 [shape = 's32[1]{0}', space=sflag, size = 0x4, scoped, tag = 'scoped memory for tile.13']
  %s0 = inlined_call_operand.vmem [shape: f32[8], index: 0, kind: input, shape index: {}]
  %s1 = inlined_call_operand.vmem [shape: f32[32,8], index: 1, kind: output, shape index: {}]
  // Predicated region
  $region2: #{tile.13} parent=0 // pred_check
    _
  $region3: #{tile.13} parent=0 // pred_check_branch
    %3 = sbr.rel (0) target = $region5
  $region4: #{tile.13} parent=0 // pred_region
    _
  $region5: #{tile.13} parent=0 // pred_fallthru
    _
  %v4 = vld [vmem:[%s0] ss:$0 sm:$0xff]
  %5 = vst [vmem:[%s1] sm:$0xff] %v4
  %s6 = scalar_lea.vmem %s1, 8
  %7 = vst [vmem:[%s6] sm:$0xff] %v4
  %s8 = scalar_lea.vmem %s1, 16
  %9 = vst [vmem:[%s8] sm:$0xff] %v4
  %s10 = scalar_lea.vmem %s1, 24
  %11 = vst [vmem:[%s10] sm:$0xff] %v4

// kernel: tile.14
$region0: #{tile.14}
  %s0 = inlined_call_operand.vmem [shape: f32[32,8], index: 0, kind: input, shape index: {}]
  %s1 = inlined_call_operand.vmem [shape: f32[1,256], index: 1, kind: output, shape index: {}]
  $region1: #{tile.14} parent=0
    #allocation0 [shape = 'u8[8192]{0}', space=vmem, size = 0x2000, scoped, tag = 'scoped mem for output reshape']
    %s2 = smov 3
    %v3 = vld [vmem:[%s0] ss:$16 sm:%s2]
    %vm4 = vcmask 64512
    %5 = vst.msk [vmem:[#allocation0] ss:$8 sm:$0x3] %vm4, %v3
    %s6 = scalar_lea.vmem %s0, 15
    %s7 = smov 3
    %v8 = vld [vmem:[%s6] ss:$16 sm:%s7]
    %9 = vrot.lane.b32.xlu0 %v8, 120
    %v10 = vpop.permute.xlu0 %9
    %vm11 = vcmask 1048512
    %12 = vst.msk [vmem:[#allocation0] ss:$8 sm:$0x3] %vm11, %v10
    %s13 = scalar_lea.vmem %s0, 14
    %s14 = smov 3
    %v15 = vld [vmem:[%s13] ss:$16 sm:%s14]
    %16 = vrot.lane.b32.xlu0 %v15, 112
    %v17 = vpop.permute.xlu0 %16
    %vm18 = vcmask 982912
    %19 = vst.msk [vmem:[#allocation0] ss:$8 sm:$0x3] %vm18, %v17
    %s20 = scalar_lea.vmem %s0, 13
    %s21 = smov 3
    %v22 = vld [vmem:[%s20] ss:$16 sm:%s21]
    %23 = vrot.lane.b32.xlu0 %v22, 104
    %v24 = vpop.permute.xlu0 %23
    %vm25 = vcmask 917312
    %26 = vst.msk [vmem:[#allocation0] ss:$8 sm:$0x3] %vm25, %v24
    %s27 = scalar_lea.vmem %s0, 12
    %s28 = smov 3
    %v29 = vld [vmem:[%s27] ss:$16 sm:%s28]
    %30 = vrot.lane.b32.xlu0 %v29, 96
    %v31 = vpop.permute.xlu0 %30
    %vm32 = vcmask 851712
    %33 = vst.msk [vmem:[#allocation0] ss:$8 sm:$0x3] %vm32, %v31
    %s34 = scalar_lea.vmem %s0, 11
    %s35 = smov 3
    %v36 = vld [vmem:[%s34] ss:$16 sm:%s35]
    %37 = vrot.lane.b32.xlu0 %v36, 88
    %v38 = vpop.permute.xlu0 %37
    %vm39 = vcmask 786112
    %40 = vst.msk [vmem:[#allocation0] ss:$8 sm:$0x3] %vm39, %v38
    %s41 = scalar_lea.vmem %s0, 10
    %s42 = smov 3
    %v43 = vld [vmem:[%s41] ss:$16 sm:%s42]
    %44 = vrot.lane.b32.xlu0 %v43, 80
    %v45 = vpop.permute.xlu0 %44
    %vm46 = vcmask 720512
    %47 = vst.msk [vmem:[#allocation0] ss:$8 sm:$0x3] %vm46, %v45
    %s48 = scalar_lea.vmem %s0, 9
    %s49 = smov 3
    %v50 = vld [vmem:[%s48] ss:$16 sm:%s49]
    %51 = vrot.lane.b32.xlu0 %v50, 72
    %v52 = vpop.permute.xlu0 %51
    %vm53 = vcmask 654912
    %54 = vst.msk [vmem:[#allocation0] ss:$8 sm:$0x3] %vm53, %v52
    %s55 = scalar_lea.vmem %s0, 8
    %s56 = smov 3
    %v57 = vld [vmem:[%s55] ss:$16 sm:%s56]
    %58 = vrot.lane.b32.xlu0 %v57, 64
    %v59 = vpop.permute.xlu0 %58
    %vm60 = vcmask 589312
    %61 = vst.msk [vmem:[#allocation0] ss:$8 sm:$0x3] %vm60, %v59
    %s62 = scalar_lea.vmem %s0, 7
    %s63 = smov 3
    %v64 = vld [vmem:[%s62] ss:$16 sm:%s63]
    %65 = vrot.lane.b32.xlu0 %v64, 56
    %v66 = vpop.permute.xlu0 %65
    %vm67 = vcmask 523712
    %68 = vst.msk [vmem:[#allocation0] ss:$8 sm:$0x3] %vm67, %v66
    %s69 = scalar_lea.vmem %s0, 6
    %s70 = smov 3
    %v71 = vld [vmem:[%s69] ss:$16 sm:%s70]
    %72 = vrot.lane.b32.xlu0 %v71, 48
    %v73 = vpop.permute.xlu0 %72
    %vm74 = vcmask 458112
    %75 = vst.msk [vmem:[#allocation0] ss:$8 sm:$0x3] %vm74, %v73
    %s76 = scalar_lea.vmem %s0, 5
    %s77 = smov 3
    %v78 = vld [vmem:[%s76] ss:$16 sm:%s77]
    %79 = vrot.lane.b32.xlu0 %v78, 40
    %v80 = vpop.permute.xlu0 %79
    %vm81 = vcmask 392512
    %82 = vst.msk [vmem:[#allocation0] ss:$8 sm:$0x3] %vm81, %v80
    %s83 = scalar_lea.vmem %s0, 4
    %s84 = smov 3
    %v85 = vld [vmem:[%s83] ss:$16 sm:%s84]
    %86 = vrot.lane.b32.xlu0 %v85, 32
    %v87 = vpop.permute.xlu0 %86
    %vm88 = vcmask 326912
    %89 = vst.msk [vmem:[#allocation0] ss:$8 sm:$0x3] %vm88, %v87
    %s90 = scalar_lea.vmem %s0, 3
    %s91 = smov 3
    %v92 = vld [vmem:[%s90] ss:$16 sm:%s91]
    %93 = vrot.lane.b32.xlu0 %v92, 24
    %v94 = vpop.permute.xlu0 %93
    %vm95 = vcmask 261312
    %96 = vst.msk [vmem:[#allocation0] ss:$8 sm:$0x3] %vm95, %v94
    %s97 = scalar_lea.vmem %s0, 2
    %s98 = smov 3
    %v99 = vld [vmem:[%s97] ss:$16 sm:%s98]
    %100 = vrot.lane.b32.xlu0 %v99, 16
    %v101 = vpop.permute.xlu0 %100
    %vm102 = vcmask 195712
    %103 = vst.msk [vmem:[#allocation0] ss:$8 sm:$0x3] %vm102, %v101
    %s104 = scalar_lea.vmem %s0, 1
    %s105 = smov 3
    %v106 = vld [vmem:[%s104] ss:$16 sm:%s105]
    %107 = vrot.lane.b32.xlu0 %v106, 8
    %v108 = vpop.permute.xlu0 %107
    %vm109 = vcmask 130112
    %110 = vst.msk [vmem:[#allocation0] ss:$8 sm:$0x3] %vm109, %v108
    %s112 = sshllo.u32 0, 1
    %v114 = vld [vmem:[#allocation0] sm:%s112]
    %s115 = sshllo.u32 0, 1
    %116 = vst [vmem:[%s1] sm:%s115] %v114
    %s117 = scalar_lea.vmem [#allocation0], 8
    %v118 = vld [vmem:[%s117] sm:%s112]
    %s119 = sshllo.u32 0, 1
    %s120 = scalar_lea.vmem %s1, 1
    %121 = vst [vmem:[%s120] sm:%s119] %v118

// kernel: up_conv_forward.2
$region0: #{up_conv_forward.2}
  #allocation0 [shape = 'u32[]', space=smem, size = 0x4, offset = 0x4, fixed_abs, tag = 'smem constant byte address 0x4 - core index']
  #allocation1 [shape = 'u32[144,128]{1,0:T(1,128)}', space=vmem, size = 0x12000, scoped, tag = 'internal scratch']
  #allocation2 [shape = 'f32[34,136]{1,0:T(8,128)}', space=vmem, size = 0xa000, scoped, tag = 'scratch operand']
  %s0 = inlined_call_operand.vmem [shape: f32[2,16,64], index: 0, kind: input, shape index: {}]
  %s1 = inlined_call_operand.vmem [shape: f32[32,16], index: 1, kind: input, shape index: {}]
  %s2 = inlined_call_operand.vmem [shape: f32[64,136], index: 2, kind: input, shape index: {}]
  %s3 = inlined_call_operand.vmem [shape: bf16[3,136,256], index: 3, kind: input, shape index: {}]
  %s4 = inlined_call_operand.vmem [shape: f32[2,32,256], index: 4, kind: output, shape index: {0}]
  %s5 = inlined_call_operand.vmem [shape: f32[2,2,256], index: 5, kind: output, shape index: {1}]
  %6 = xla_tuple %s4, %s5
  %s7 = sld [smem:[#allocation0]]
  $region57: #{up_conv_forward.2} parent=0
    _
  %s9 = ssub.s32 1, %s7
  %s10 = scalar_select 0, %s9, %s7
  loop: start=0, step=1, limit=4
  $region2: #{up_conv_forward.2} parent=0 // loop_pre_header
    _
  $region3: #{up_conv_forward.2} parent=0 // loop_header
    %s12 = sphi 0, %s16
    %p13 = scmp.ge.s32.totalorder %s12, 4
    %s22 = sphi 0, %s24
    %s25 = sphi 0, %s22
    %s26 = sphi 0, %s25
    %s42 = sphi 0, %s26
    %s46 = sphi 0, %s46
    %s48 = sphi 0, %s46
    %s49 = sphi 0, %s48
    %s63 = sphi 0, %s49
    %s67 = sphi 0, %s67
    %s69 = sphi 0, %s67
    %s70 = sphi 0, %s69
    %s84 = sphi 0, %s70
    %s88 = sphi 0, %s88
    %s90 = sphi 0, %s88
    %s91 = sphi 0, %s90
    %s105 = sphi 0, %s91
    %s111 = sphi 0, %s113
    %s114 = sphi 0, %s111
    %s115 = sphi 0, %s114
    %s131 = sphi 0, %s115
    %s137 = sphi 0, %s139
    %s140 = sphi 0, %s137
    %s141 = sphi 0, %s140
    %s157 = sphi 0, %s141
  $region4: #{up_conv_forward.2} parent=0 // loop_header_branch
    %15 = sbr.rel (%p13) target = $region8
  $region5: #{up_conv_forward.2} parent=0 // loop_body
    %s17 = ssub.s32 %s12, 1
    %s18 = ssub.s32 %s12, 2
    %s19 = sadd.s32 %s12, 1
    %s20 = ssub.s32 %s12, %s19
    %p21 = scmp.eq.s32.totalorder %s20, 0
    %s23 = sadd.s32 %s22, 1
    %s24 = scalar_select %p21, %s22, %s23
    %p27 = pneg %p21
    %p28 = scmp.eq.s32.totalorder %s12, 1
    %p29 = por %p27, %p28
    %p30 = scmp.ne.s32.totalorder %s22, %s25
    %p31 = scmp.eq.s32.totalorder %s12, 0
    %p32 = por %p30, %p31
    %p33 = scmp.ne.s32.totalorder %s22, %s25
    %p34 = scmp.eq.s32.totalorder %s17, 1
    %p35 = por %p33, %p34
    %p36 = scmp.ne.s32.totalorder %s25, %s26
    %p37 = scmp.eq.s32.totalorder %s17, 0
    %p38 = por %p36, %p37
    %p39 = scmp.ne.s32.totalorder %s25, %s26
    %p40 = scmp.eq.s32.totalorder %s18, 1
    %p41 = por %p39, %p40
    %p43 = scmp.ne.s32.totalorder %s26, %s42
    %p44 = scmp.eq.s32.totalorder %s18, 0
    %p45 = por %p43, %p44
    %s47 = sadd.s32 %s46, 1
    %p50 = scmp.eq.s32.totalorder %s12, 1
    %p51 = scmp.ne.s32.totalorder %s46, %s48
    %p52 = scmp.eq.s32.totalorder %s12, 0
    %p53 = por %p51, %p52
    %p54 = scmp.ne.s32.totalorder %s46, %s48
    %p55 = scmp.eq.s32.totalorder %s17, 1
    %p56 = por %p54, %p55
    %p57 = scmp.ne.s32.totalorder %s48, %s49
    %p58 = scmp.eq.s32.totalorder %s17, 0
    %p59 = por %p57, %p58
    %p60 = scmp.ne.s32.totalorder %s48, %s49
    %p61 = scmp.eq.s32.totalorder %s18, 1
    %p62 = por %p60, %p61
    %p64 = scmp.ne.s32.totalorder %s49, %s63
    %p65 = scmp.eq.s32.totalorder %s18, 0
    %p66 = por %p64, %p65
    %s68 = sadd.s32 %s67, 1
    %p71 = scmp.eq.s32.totalorder %s12, 1
    %p72 = scmp.ne.s32.totalorder %s67, %s69
    %p73 = scmp.eq.s32.totalorder %s12, 0
    %p74 = por %p72, %p73
    %p75 = scmp.ne.s32.totalorder %s67, %s69
    %p76 = scmp.eq.s32.totalorder %s17, 1
    %p77 = por %p75, %p76
    %p78 = scmp.ne.s32.totalorder %s69, %s70
    %p79 = scmp.eq.s32.totalorder %s17, 0
    %p80 = por %p78, %p79
    %p81 = scmp.ne.s32.totalorder %s69, %s70
    %p82 = scmp.eq.s32.totalorder %s18, 1
    %p83 = por %p81, %p82
    %p85 = scmp.ne.s32.totalorder %s70, %s84
    %p86 = scmp.eq.s32.totalorder %s18, 0
    %p87 = por %p85, %p86
    %s89 = sadd.s32 %s88, 1
    %p92 = scmp.eq.s32.totalorder %s12, 1
    %p93 = scmp.ne.s32.totalorder %s88, %s90
    %p94 = scmp.eq.s32.totalorder %s12, 0
    %p95 = por %p93, %p94
    %p96 = scmp.ne.s32.totalorder %s88, %s90
    %p97 = scmp.eq.s32.totalorder %s17, 1
    %p98 = por %p96, %p97
    %p99 = scmp.ne.s32.totalorder %s90, %s91
    %p100 = scmp.eq.s32.totalorder %s17, 0
    %p101 = por %p99, %p100
    %p102 = scmp.ne.s32.totalorder %s90, %s91
    %p103 = scmp.eq.s32.totalorder %s18, 1
    %p104 = por %p102, %p103
    %p106 = scmp.ne.s32.totalorder %s91, %s105
    %p107 = scmp.eq.s32.totalorder %s18, 0
    %p108 = por %p106, %p107
    %s109 = ssub.s32 %s12, %s19
    %p110 = scmp.eq.s32.totalorder %s109, 0
    %s112 = sadd.s32 %s111, 1
    %s113 = scalar_select %p110, %s111, %s112
    %p116 = pneg %p110
    %p117 = scmp.eq.s32.totalorder %s12, 1
    %p118 = por %p116, %p117
    %p119 = scmp.ne.s32.totalorder %s111, %s114
    %p120 = scmp.eq.s32.totalorder %s12, 0
    %p121 = por %p119, %p120
    %p122 = scmp.ne.s32.totalorder %s111, %s114
    %p123 = scmp.eq.s32.totalorder %s17, 1
    %p124 = por %p122, %p123
    %p125 = scmp.ne.s32.totalorder %s114, %s115
    %p126 = scmp.eq.s32.totalorder %s17, 0
    %p127 = por %p125, %p126
    %p128 = scmp.ne.s32.totalorder %s114, %s115
    %p129 = scmp.eq.s32.totalorder %s18, 1
    %p130 = por %p128, %p129
    %p132 = scmp.ne.s32.totalorder %s115, %s131
    %p133 = scmp.eq.s32.totalorder %s18, 0
    %p134 = por %p132, %p133
    %s135 = ssub.s32 %s12, %s19
    %p136 = scmp.eq.s32.totalorder %s135, 0
    %s138 = sadd.s32 %s137, 1
    %s139 = scalar_select %p136, %s137, %s138
    %p142 = pneg %p136
    %p143 = scmp.eq.s32.totalorder %s12, 1
    %p144 = por %p142, %p143
    %p145 = scmp.ne.s32.totalorder %s137, %s140
    %p146 = scmp.eq.s32.totalorder %s12, 0
    %p147 = por %p145, %p146
    %p148 = scmp.ne.s32.totalorder %s137, %s140
    %p149 = scmp.eq.s32.totalorder %s17, 1
    %p150 = por %p148, %p149
    %p151 = scmp.ne.s32.totalorder %s140, %s141
    %p152 = scmp.eq.s32.totalorder %s17, 0
    %p153 = por %p151, %p152
    %p154 = scmp.ne.s32.totalorder %s140, %s141
    %p155 = scmp.eq.s32.totalorder %s18, 1
    %p156 = por %p154, %p155
    %p158 = scmp.ne.s32.totalorder %s141, %s157
    %p159 = scmp.eq.s32.totalorder %s18, 0
    %p160 = por %p158, %p159
    %p161 = scmp.le.s32.totalorder 1, %s12
    %p162 = scmp.lt.s32.totalorder %s12, 3
    %p163 = pnand %p161, %p162
    %p164 = pneg %p163
    // Predicated region
    $region9: #{up_conv_forward.2} parent=5 // pred_check
      _
    $region10: #{up_conv_forward.2} parent=5 // pred_check_branch
      %166 = sbr.rel (%p163) target = $region12
    $region11: #{up_conv_forward.2} parent=5 // pred_region
      %s167 = ssub.s32 %s12, 1
      // Predicated region
      $region13: #{up_conv_forward.2} parent=11 // pred_check
        %p168 = pneg %p59
      $region14: #{up_conv_forward.2} parent=11 // pred_check_branch
        %170 = sbr.rel (%p168) target = $region16
      $region15: #{up_conv_forward.2} parent=11 // pred_region
        _
      $region16: #{up_conv_forward.2} parent=11 // pred_fallthru
        _
      // Predicated region
      $region17: #{up_conv_forward.2} parent=11 // pred_check
        %p171 = pneg %p80
      $region18: #{up_conv_forward.2} parent=11 // pred_check_branch
        %173 = sbr.rel (%p171) target = $region20
      $region19: #{up_conv_forward.2} parent=11 // pred_region
        _
      $region20: #{up_conv_forward.2} parent=11 // pred_fallthru
        _
      // Predicated region
      $region21: #{up_conv_forward.2} parent=11 // pred_check
        %p174 = pneg %p101
      $region22: #{up_conv_forward.2} parent=11 // pred_check_branch
        %176 = sbr.rel (%p174) target = $region24
      $region23: #{up_conv_forward.2} parent=11 // pred_region
        _
      $region24: #{up_conv_forward.2} parent=11 // pred_fallthru
        _
    $region12: #{up_conv_forward.2} parent=5 // pred_fallthru
      _
    %p177 = scmp.lt.s32.totalorder %s12, 2
    // Predicated region
    $region25: #{up_conv_forward.2} parent=5 // pred_check
      %p178 = pneg %p177
    $region26: #{up_conv_forward.2} parent=5 // pred_check_branch
      %180 = sbr.rel (%p178) target = $region28
    $region27: #{up_conv_forward.2} parent=5 // pred_region
      // Predicated region
      $region29: #{up_conv_forward.2} parent=27 // pred_check
        %p181 = pneg %p32
      $region30: #{up_conv_forward.2} parent=27 // pred_check_branch
        %183 = sbr.rel (%p181) target = $region32
      $region31: #{up_conv_forward.2} parent=27 // pred_region
        %p184 = scmp.lt.s32.totalorder %s12, 1
        %s185 = scalar_select %p184, %s12, 1
        %s186 = smul.addr %s185, 2
        %s187 = smul.addr %s186, 8
        %s188 = scalar_lea.vmem %s0, %s187
      $region32: #{up_conv_forward.2} parent=27 // pred_fallthru
        _
    $region28: #{up_conv_forward.2} parent=5 // pred_fallthru
      _
    %p189 = scmp.le.s32.totalorder 1, %s12
    %p190 = scmp.lt.s32.totalorder %s12, 3
    %p191 = pnand %p189, %p190
    %p192 = pneg %p191
    // Predicated region
    $region33: #{up_conv_forward.2} parent=5 // pred_check
      _
    $region34: #{up_conv_forward.2} parent=5 // pred_check_branch
      %194 = sbr.rel (%p191) target = $region36
    $region35: #{up_conv_forward.2} parent=5 // pred_region
      %s195 = ssub.s32 %s12, 1
      %p196 = scmp.lt.s32.totalorder %s17, 1
      %s197 = scalar_select %p196, %s17, 1
      %s198 = smul.addr %s197, 2
      %s199 = smul.addr %s198, 8
      %s200 = scalar_lea.vmem %s0, %s199
      %p201 = pneg %p38
      %p202 = pneg %p35
      %p203 = pneg %p59
      %p204 = pneg %p56
      %p205 = pneg %p80
      %p206 = pneg %p77
      %p207 = pneg %p101
      %p208 = pneg %p98
      %p209 = pneg %p127
      %p210 = pneg %p124
      %p211 = scmp.lt.s32.totalorder %s17, 1
      %s212 = scalar_select %p211, %s17, 1
      %s213 = smul.addr %s212, 8
      %s214 = smul.addr %s213, 8
      %s215 = scalar_lea.vmem %s4, %s214
      %p216 = pneg %p153
      %p217 = pneg %p150
      %p218 = scmp.lt.s32.totalorder %s17, 1
      %s219 = scalar_select %p218, %s17, 1
      %s220 = smul.addr %s219, 2
      %s221 = smul.addr %s220, 2
      %s222 = scalar_lea.vmem %s5, %s221
      %p223 = scmp.lt.s32.totalorder %s17, 1
      %s224 = scalar_select %p223, %s17, 1
      %s225 = smul.addr %s224, 2
      %s226 = smul.addr %s225, 8
      %s227 = scalar_lea.vmem %s0, %s226
      %p228 = scmp.lt.s32.totalorder %s17, 1
      %s229 = scalar_select %p228, %s17, 1
      %s230 = smul.addr %s229, 8
      %s231 = smul.addr %s230, 8
      %s232 = scalar_lea.vmem %s4, %s231
      %p233 = scmp.lt.s32.totalorder %s17, 1
      %s234 = scalar_select %p233, %s17, 1
      %s235 = smul.addr %s234, 2
      %s236 = smul.addr %s235, 2
      %s237 = scalar_lea.vmem %s5, %s236
      %v239 = vld [vmem:[%s1] sm:$0xff]
      %v240 = vld [vmem:[%s1 + $0x8] sm:$0xff]
      %v241 = vld [vmem:[%s1 + $0x10] sm:$0xff]
      %v242 = vld [vmem:[%s1 + $0x18] sm:$0xff]
      %v243 = vld [vmem:[%s227] sm:$0xff]
      %v244 = vld [vmem:[%s227 + $0x8] sm:$0xff]
      %vm245 = vcmask 130048
      %v247 = vsel %vm245, %v239, 0
      %v250 = vsel %vm245, %v240, 0
      %v253 = vsel %vm245, %v241, 0
      %v256 = vsel %vm245, %v242, 0
      %258 = vmatprep.subr.mxu0 0.0
      %259 = vmatpush1.msra.mxu0 %v243
      %260 = vmatprep.subr.mxu0 0.0
      %261 = vmatpush1.msra.mxu0 %v244
      %262 = vmatprep.subr.mxu0 0.0
      %263 = vmatpush1.msra.mxu0 0.0
      %264 = vmatprep.subr.mxu0 0.0
      %265 = vmatpush1.msra.mxu0 0.0
      %266 = vmatprep.subr.mxu0 0.0
      %267 = vmatpush1.msra.mxu0 0.0
      %268 = vmatprep.subr.mxu0 0.0
      %269 = vmatpush1.msra.mxu0 0.0
      %270 = vmatprep.subr.mxu0 0.0
      %271 = vmatpush1.msra.mxu0 0.0
      %272 = vmatprep.subr.mxu0 0.0
      %273 = vmatpush1.msra.mxu0 0.0
      %274 = vmatprep.subr.mxu0 0.0
      %275 = vmatpush1.msra.mxu0 0.0
      %276 = vmatprep.subr.mxu0 0.0
      %277 = vmatpush1.msra.mxu0 0.0
      %278 = vmatprep.subr.mxu0 0.0
      %279 = vmatpush1.msra.mxu0 0.0
      %280 = vmatprep.subr.mxu0 0.0
      %281 = vmatpush1.msra.mxu0 0.0
      %282 = vmatprep.subr.mxu0 0.0
      %283 = vmatpush1.msra.mxu0 0.0
      %284 = vmatprep.subr.mxu0 0.0
      %285 = vmatpush1.msra.mxu0 0.0
      %286 = vmatprep.subr.mxu0 0.0
      %287 = vmatpush1.msra.mxu0 0.0
      %288 = vmatprep.subr.mxu0 0.0
      %289 = vmatpush1.msra.mxu0 0.0
      %290 = vmatprep.subr.mxu0 0.0
      %291 = vmatpush1.msra.mxu0 0.0
      %292 = vmatprep.subr.mxu0 0.0
      %293 = vmatpush1.msra.mxu0 0.0
      %294 = vmatprep.subr.mxu0 0.0
      %295 = vmatpush1.msra.mxu0 0.0
      %296 = vmatprep.subr.mxu0 0.0
      %297 = vmatpush1.msra.mxu0 0.0
      %298 = vmatprep.subr.mxu0 0.0
      %299 = vmatpush1.msra.mxu0 0.0
      %300 = vmatprep.subr.mxu0 0.0
      %301 = vmatpush1.msra.mxu0 0.0
      %302 = vmatprep.subr.mxu0 0.0
      %303 = vmatpush1.msra.mxu0 0.0
      %304 = vmatprep.subr.mxu0 0.0
      %305 = vmatpush1.msra.mxu0 0.0
      %306 = vmatprep.subr.mxu0 0.0
      %307 = vmatpush1.msra.mxu0 0.0
      %308 = vmatprep.subr.mxu0 0.0
      %309 = vmatpush1.msra.mxu0 0.0
      %310 = vmatprep.subr.mxu0 0.0
      %311 = vmatpush1.msra.mxu0 0.0
      %312 = vmatprep.subr.mxu0 0.0
      %313 = vmatpush1.msra.mxu0 0.0
      %314 = vmatprep.subr.mxu0 0.0
      %315 = vmatpush1.msra.mxu0 0.0
      %316 = vmatprep.subr.mxu0 0.0
      %317 = vmatpush1.msra.mxu0 0.0
      %318 = vmatprep.subr.mxu0 0.0
      %319 = vmatpush1.msra.mxu0 0.0
      %320 = vmatprep.subr.mxu0 0.0
      %321 = vmatpush1.msra.mxu0 0.0
      %322 = vmatprep.mubr.f32.mxu0 0.0
      %323 = vmatmul.mubr.f32.gmra.mrb[0].mxu0 %v247
      %v324 = vpop.f32.mrb[0].mxu0
      %v325 = vadd.f32 0.0, %v324
      %v326 = vpop.f32.mrb[0].mxu0
      %327 = vmatprep.mubr.f32.mxu0 0.0
      %328 = vmatmul.mubr.f32.gmra.mrb[0].mxu0 %v250
      %v329 = vpop.f32.mrb[0].mxu0
      %v330 = vadd.f32 0.0, %v329
      %v331 = vpop.f32.mrb[0].mxu0
      %332 = vmatprep.mubr.f32.mxu0 0.0
      %333 = vmatmul.mubr.f32.gmra.mrb[0].mxu0 %v253
      %v334 = vpop.f32.mrb[0].mxu0
      %v335 = vadd.f32 0.0, %v334
      %v336 = vpop.f32.mrb[0].mxu0
      %337 = vmatprep.mubr.f32.mxu0 0.0
      %338 = vmatmul.mubr.f32.gmra.mrb[0].mxu0 %v256
      %v339 = vpop.f32.mrb[0].mxu0
      %v340 = vadd.f32 0.0, %v339
      %v341 = vpop.f32.mrb[0].mxu0
      %342 = vdwg.mxu0
      %v343 = vld [vmem:[%s2] sm:$0xff]
      %v344 = vld [vmem:[%s2 + $0x8] sm:$0xff]
      %v345 = vld [vmem:[%s2 + $0x10] sm:$0xff]
      %v346 = vld [vmem:[%s2 + $0x18] sm:$0xff]
      %v347 = vld [vmem:[%s2 + $0x20] sm:$0xff]
      %v348 = vld [vmem:[%s2 + $0x28] sm:$0xff]
      %v349 = vld [vmem:[%s2 + $0x30] sm:$0xff]
      %v350 = vld [vmem:[%s2 + $0x38] sm:$0xff]
      %v351 = vld [vmem:[%s2 + $0x40] sm:$0xff]
      %v352 = vld [vmem:[%s2 + $0x48] sm:$0xff]
      %v353 = vld [vmem:[%s2 + $0x50] sm:$0xff]
      %v354 = vld [vmem:[%s2 + $0x58] sm:$0xff]
      %v355 = vld [vmem:[%s2 + $0x60] sm:$0xff]
      %v356 = vld [vmem:[%s2 + $0x68] sm:$0xff]
      %v357 = vld [vmem:[%s2 + $0x70] sm:$0xff]
      %v358 = vld [vmem:[%s2 + $0x78] sm:$0xff]
      %vm359 = vcmask 523264
      %v361 = vsel %vm359, %v325, 0
      %v364 = vsel %vm359, %v330, 0
      %v367 = vsel %vm359, %v335, 0
      %v370 = vsel %vm359, %v340, 0
      %372 = vmatprep.subr.mxu0 %v344
      %373 = vmatpush1.msra.mxu0 %v343
      %374 = vmatprep.subr.mxu0 %v346
      %375 = vmatpush1.msra.mxu0 %v345
      %376 = vmatprep.subr.mxu0 %v348
      %377 = vmatpush1.msra.mxu0 %v347
      %378 = vmatprep.subr.mxu0 %v350
      %379 = vmatpush1.msra.mxu0 %v349
      %380 = vmatprep.subr.mxu0 %v352
      %381 = vmatpush1.msra.mxu0 %v351
      %382 = vmatprep.subr.mxu0 %v354
      %383 = vmatpush1.msra.mxu0 %v353
      %384 = vmatprep.subr.mxu0 %v356
      %385 = vmatpush1.msra.mxu0 %v355
      %386 = vmatprep.subr.mxu0 %v358
      %387 = vmatpush1.msra.mxu0 %v357
      %388 = vmatprep.subr.mxu0 0.0
      %389 = vmatpush1.msra.mxu0 0.0
      %390 = vmatprep.subr.mxu0 0.0
      %391 = vmatpush1.msra.mxu0 0.0
      %392 = vmatprep.subr.mxu0 0.0
      %393 = vmatpush1.msra.mxu0 0.0
      %394 = vmatprep.subr.mxu0 0.0
      %395 = vmatpush1.msra.mxu0 0.0
      %396 = vmatprep.subr.mxu0 0.0
      %397 = vmatpush1.msra.mxu0 0.0
      %398 = vmatprep.subr.mxu0 0.0
      %399 = vmatpush1.msra.mxu0 0.0
      %400 = vmatprep.subr.mxu0 0.0
      %401 = vmatpush1.msra.mxu0 0.0
      %402 = vmatprep.subr.mxu0 0.0
      %403 = vmatpush1.msra.mxu0 0.0
      %404 = vmatprep.subr.mxu0 0.0
      %405 = vmatpush1.msra.mxu0 0.0
      %406 = vmatprep.subr.mxu0 0.0
      %407 = vmatpush1.msra.mxu0 0.0
      %408 = vmatprep.subr.mxu0 0.0
      %409 = vmatpush1.msra.mxu0 0.0
      %410 = vmatprep.subr.mxu0 0.0
      %411 = vmatpush1.msra.mxu0 0.0
      %412 = vmatprep.subr.mxu0 0.0
      %413 = vmatpush1.msra.mxu0 0.0
      %414 = vmatprep.subr.mxu0 0.0
      %415 = vmatpush1.msra.mxu0 0.0
      %416 = vmatprep.subr.mxu0 0.0
      %417 = vmatpush1.msra.mxu0 0.0
      %418 = vmatprep.subr.mxu0 0.0
      %419 = vmatpush1.msra.mxu0 0.0
      %420 = vmatprep.subr.mxu0 0.0
      %421 = vmatpush1.msra.mxu0 0.0
      %422 = vmatprep.subr.mxu0 0.0
      %423 = vmatpush1.msra.mxu0 0.0
      %424 = vmatprep.subr.mxu0 0.0
      %425 = vmatpush1.msra.mxu0 0.0
      %426 = vmatprep.subr.mxu0 0.0
      %427 = vmatpush1.msra.mxu0 0.0
      %428 = vmatprep.subr.mxu0 0.0
      %429 = vmatpush1.msra.mxu0 0.0
      %430 = vmatprep.subr.mxu0 0.0
      %431 = vmatpush1.msra.mxu0 0.0
      %432 = vmatprep.subr.mxu0 0.0
      %433 = vmatpush1.msra.mxu0 0.0
      %434 = vmatprep.subr.mxu0 0.0
      %435 = vmatpush1.msra.mxu0 0.0
      %436 = vmatprep.mubr.f32.mxu0 0.0
      %437 = vmatmul.mubr.f32.gmra.mrb[0].mxu0 %v361
      %v438 = vpop.f32.mrb[0].mxu0
      %v439 = vadd.f32 0.0, %v438
      %v440 = vpop.f32.mrb[0].mxu0
      %v441 = vadd.f32 0.0, %v440
      %442 = vmatprep.mubr.f32.mxu0 0.0
      %443 = vmatmul.mubr.f32.gmra.mrb[0].mxu0 %v364
      %v444 = vpop.f32.mrb[0].mxu0
      %v445 = vadd.f32 0.0, %v444
      %v446 = vpop.f32.mrb[0].mxu0
      %v447 = vadd.f32 0.0, %v446
      %448 = vmatprep.mubr.f32.mxu0 0.0
      %449 = vmatmul.mubr.f32.gmra.mrb[0].mxu0 %v367
      %v450 = vpop.f32.mrb[0].mxu0
      %v451 = vadd.f32 0.0, %v450
      %v452 = vpop.f32.mrb[0].mxu0
      %v453 = vadd.f32 0.0, %v452
      %454 = vmatprep.mubr.f32.mxu0 0.0
      %455 = vmatmul.mubr.f32.gmra.mrb[0].mxu0 %v370
      %v456 = vpop.f32.mrb[0].mxu0
      %v457 = vadd.f32 0.0, %v456
      %v458 = vpop.f32.mrb[0].mxu0
      %v459 = vadd.f32 0.0, %v458
      %460 = vdwg.mxu0
      %v461 = vlaneseq
      %vm462 = vcmp.ge.s32.totalorder %v461, 0
      %vm463 = vcmp.lt.s32.totalorder %v461, 136
      %vm464 = vmand %vm462, %vm463
      %465 = vst.msk [vmem:[#allocation2] ss:$8 sm:$0x3] %vm464, 0.0
      %466 = vst.msk [vmem:[#allocation2] ss:$8 sm:$0x0] %vm464, 0.0
      %s467 = scalar_lea.vmem [#allocation2], 65
      %468 = vst.msk [vmem:[%s467] ss:$8 sm:$0x3] %vm464, 0.0
      %469 = vst.msk [vmem:[%s467] ss:$8 sm:$0x0] %vm464, 0.0
      %vm478 = vcmask 1040384
      %v479 = vrot.slane %v439, 7
      %v480 = vrot.slane %v441, 7
      %v481 = vrot.slane %v445, 7
      %v482 = vsel %vm478, %v479, %v481
      %v483 = vrot.slane %v447, 7
      %v484 = vsel %vm478, %v480, %v483
      %v485 = vrot.slane %v451, 7
      %v486 = vsel %vm478, %v481, %v485
      %v487 = vrot.slane %v453, 7
      %v488 = vsel %vm478, %v483, %v487
      %v489 = vrot.slane %v457, 7
      %v490 = vsel %vm478, %v485, %v489
      %v491 = vrot.slane %v459, 7
      %v492 = vsel %vm478, %v487, %v491
      %503 = vst [vmem:[#allocation2] sm:$0xfe] %v479
      %vm504 = vcmask 64513
      %505 = vst.msk [vmem:[#allocation2 + $0x8] sm:$0xfe] %vm504, %v480
      %506 = vst [vmem:[#allocation2 + $0x10] sm:$0xff] %v482
      %vm507 = vcmask 64512
      %508 = vst.msk [vmem:[#allocation2 + $0x18] sm:$0xff] %vm507, %v484
      %509 = vst [vmem:[#allocation2 + $0x20] sm:$0xff] %v486
      %510 = vst.msk [vmem:[#allocation2 + $0x28] sm:$0xff] %vm507, %v488
      %511 = vst [vmem:[#allocation2 + $0x30] sm:$0xff] %v490
      %512 = vst.msk [vmem:[#allocation2 + $0x38] sm:$0xff] %vm507, %v492
      %513 = vst [vmem:[#allocation2 + $0x40] sm:$0x1] %v489
      %vm514 = vcmask 57344
      %515 = vst.msk [vmem:[#allocation2 + $0x48] sm:$0x1] %vm514, %v491
      %v516 = vld [vmem:[#allocation2] sm:$0xff]
      %v517 = vld [vmem:[#allocation2 + $0x8] sm:$0xff]
      %v518 = vld [vmem:[#allocation2 + $0x10] sm:$0xff]
      %v519 = vld [vmem:[#allocation2 + $0x18] sm:$0xff]
      %v520 = vld [vmem:[#allocation2 + $0x20] sm:$0xff]
      %v521 = vld [vmem:[#allocation2 + $0x28] sm:$0xff]
      %v522 = vld [vmem:[#allocation2 + $0x30] sm:$0xff]
      %v523 = vld [vmem:[#allocation2 + $0x38] sm:$0xff]
      %v524 = vpack.c.bf16 %v518, %v516
      %v525 = vpack.c.bf16 %v519, %v517
      %v526 = vpack.c.bf16 %v522, %v520
      %v527 = vpack.c.bf16 %v523, %v521
      %v528 = vld [vmem:[%s3] sm:$0xff]
      %v529 = vld [vmem:[%s3 + $0x8] sm:$0xff]
      %v530 = vld [vmem:[%s3 + $0x10] sm:$0xff]
      %v531 = vld [vmem:[%s3 + $0x18] sm:$0xff]
      %v532 = vld [vmem:[%s3 + $0x20] sm:$0xff]
      %v533 = vld [vmem:[%s3 + $0x28] sm:$0xff]
      %v534 = vld [vmem:[%s3 + $0x30] sm:$0xff]
      %v535 = vld [vmem:[%s3 + $0x38] sm:$0xff]
      %v536 = vld [vmem:[%s3 + $0x40] sm:$0xff]
      %v537 = vld [vmem:[%s3 + $0x48] sm:$0xff]
      %v538 = vld [vmem:[%s3 + $0x50] sm:$0xff]
      %v539 = vld [vmem:[%s3 + $0x58] sm:$0xff]
      %v540 = vld [vmem:[%s3 + $0x60] sm:$0xff]
      %v541 = vld [vmem:[%s3 + $0x68] sm:$0xff]
      %v542 = vld [vmem:[%s3 + $0x70] sm:$0xff]
      %v543 = vld [vmem:[%s3 + $0x78] sm:$0xff]
      %v544 = vld [vmem:[%s3 + $0x80] sm:$0xff]
      %v545 = vld [vmem:[#allocation2] sm:$0xfe]
      %v546 = vld [vmem:[#allocation2 + $0x8] sm:$0xfe]
      %v547 = vld [vmem:[#allocation2 + $0x40] sm:$0x1]
      %v548 = vld [vmem:[#allocation2 + $0x48] sm:$0x1]
      %v549 = vpack.c.bf16 %v518, %v545
      %v550 = vpack.c.bf16 %v519, %v546
      %v551 = vpack.c.bf16 %v547, %v547
      %v552 = vpack.c.bf16 %v548, %v548
      %s553 = scalar_lea.vmem %s3, 136
      %v554 = vld [vmem:[%s553] sm:$0xff]
      %v555 = vld [vmem:[%s553 + $0x8] sm:$0xff]
      %v556 = vld [vmem:[%s553 + $0x10] sm:$0xff]
      %v557 = vld [vmem:[%s553 + $0x18] sm:$0xff]
      %v558 = vld [vmem:[%s553 + $0x20] sm:$0xff]
      %v559 = vld [vmem:[%s553 + $0x28] sm:$0xff]
      %v560 = vld [vmem:[%s553 + $0x30] sm:$0xff]
      %v561 = vld [vmem:[%s553 + $0x38] sm:$0xff]
      %v562 = vld [vmem:[%s553 + $0x40] sm:$0xff]
      %v563 = vld [vmem:[%s553 + $0x48] sm:$0xff]
      %v564 = vld [vmem:[%s553 + $0x50] sm:$0xff]
      %v565 = vld [vmem:[%s553 + $0x58] sm:$0xff]
      %v566 = vld [vmem:[%s553 + $0x60] sm:$0xff]
      %v567 = vld [vmem:[%s553 + $0x68] sm:$0xff]
      %v568 = vld [vmem:[%s553 + $0x70] sm:$0xff]
      %v569 = vld [vmem:[%s553 + $0x78] sm:$0xff]
      %v570 = vld [vmem:[%s553 + $0x80] sm:$0xff]
      %vm571 = vsmask.f32 7424
      %v573 = vshrl.u32 %v549, 16
      %v575 = vshll.u32 %v549, 16
      %v577 = vrot.slane %v575, 1
      %v578 = vor.u32 %v573, %v577
      %v580 = vshll.u32 %v526, 16
      %v582 = vrot.slane %v580, 1
      %v583 = vsel %vm571, %v578, %v582
      %v585 = vshrl.u32 %v550, 16
      %v587 = vshll.u32 %v550, 16
      %v589 = vrot.slane %v587, 1
      %v590 = vor.u32 %v585, %v589
      %v592 = vshll.u32 %v527, 16
      %v594 = vrot.slane %v592, 1
      %v595 = vsel %vm571, %v590, %v594
      %v596 = vshrl.u32 %v526, 16
      %v598 = vor.u32 %v596, %v582
      %v600 = vshll.u32 %v551, 16
      %v602 = vrot.slane %v600, 1
      %v603 = vsel %vm571, %v598, %v602
      %v604 = vshrl.u32 %v527, 16
      %v606 = vor.u32 %v604, %v594
      %v608 = vshll.u32 %v552, 16
      %v610 = vrot.slane %v608, 1
      %v611 = vsel %vm571, %v606, %v610
      %v631 = vunpack.c.l.b16 %v554
      %v632 = vunpack.c.h.b16 %v554
      %v633 = vunpack.c.l.b16 %v555
      %v634 = vunpack.c.h.b16 %v555
      %v635 = vunpack.c.l.b16 %v556
      %v636 = vunpack.c.h.b16 %v556
      %v637 = vunpack.c.l.b16 %v557
      %v638 = vunpack.c.h.b16 %v557
      %v639 = vunpack.c.l.b16 %v558
      %v640 = vunpack.c.h.b16 %v558
      %v641 = vunpack.c.l.b16 %v559
      %v642 = vunpack.c.h.b16 %v559
      %v643 = vunpack.c.l.b16 %v560
      %v644 = vunpack.c.h.b16 %v560
      %v645 = vunpack.c.l.b16 %v561
      %v646 = vunpack.c.h.b16 %v561
      %v647 = vunpack.c.l.b16 %v562
      %v648 = vunpack.c.h.b16 %v562
      %v649 = vunpack.c.l.b16 %v563
      %v650 = vunpack.c.h.b16 %v563
      %v651 = vunpack.c.l.b16 %v564
      %v652 = vunpack.c.h.b16 %v564
      %v653 = vunpack.c.l.b16 %v565
      %v654 = vunpack.c.h.b16 %v565
      %v655 = vunpack.c.l.b16 %v566
      %v656 = vunpack.c.h.b16 %v566
      %v657 = vunpack.c.l.b16 %v567
      %v658 = vunpack.c.h.b16 %v567
      %v659 = vunpack.c.l.b16 %v568
      %v660 = vunpack.c.h.b16 %v568
      %v661 = vunpack.c.l.b16 %v569
      %v662 = vunpack.c.h.b16 %v569
      %v663 = vunpack.c.l.b16 %v570
      %v664 = vunpack.c.h.b16 %v570
      %v665 = vpack.c.b16 %v633, %v631
      %v666 = vpack.c.b16 %v634, %v632
      %v667 = vpack.c.b16 %v637, %v635
      %v668 = vpack.c.b16 %v638, %v636
      %v669 = vpack.c.b16 %v641, %v639
      %v670 = vpack.c.b16 %v642, %v640
      %v671 = vpack.c.b16 %v645, %v643
      %v672 = vpack.c.b16 %v646, %v644
      %v673 = vpack.c.b16 %v649, %v647
      %v674 = vpack.c.b16 %v650, %v648
      %v675 = vpack.c.b16 %v653, %v651
      %v676 = vpack.c.b16 %v654, %v652
      %v677 = vpack.c.b16 %v657, %v655
      %v678 = vpack.c.b16 %v658, %v656
      %v679 = vpack.c.b16 %v661, %v659
      %v680 = vpack.c.b16 %v662, %v660
      %v681 = vpack.c.b16 %v663, %v663
      %v682 = vpack.c.b16 %v664, %v664
      %v700 = vsel %vm507, %v595, 0
      %v703 = vsel %vm507, %v611, 0
      %vm705 = vcmask 1043456
      %v707 = vsel %vm705, %v681, 0
      %v710 = vsel %vm705, %v682, 0
      %712 = vmatprep.subr.bf16.mxu0 %v666
      %713 = vmatpush1.bf16.msra.mxu0 %v665
      %714 = vmatprep.subr.bf16.mxu0 %v668
      %715 = vmatpush1.bf16.msra.mxu0 %v667
      %716 = vmatprep.subr.bf16.mxu0 %v670
      %717 = vmatpush1.bf16.msra.mxu0 %v669
      %718 = vmatprep.subr.bf16.mxu0 %v672
      %719 = vmatpush1.bf16.msra.mxu0 %v671
      %720 = vmatprep.subr.bf16.mxu0 %v674
      %721 = vmatpush1.bf16.msra.mxu0 %v673
      %722 = vmatprep.subr.bf16.mxu0 %v676
      %723 = vmatpush1.bf16.msra.mxu0 %v675
      %724 = vmatprep.subr.bf16.mxu0 %v678
      %725 = vmatpush1.bf16.msra.mxu0 %v677
      %726 = vmatprep.subr.bf16.mxu0 %v680
      %727 = vmatpush1.bf16.msra.mxu0 %v679
      %728 = vmatprep.subr.bf16.mxu0 %v710
      %729 = vmatpush1.bf16.msra.mxu0 %v707
      %730 = vmatprep.subr.bf16.mxu0 0
      %731 = vmatpush1.bf16.msra.mxu0 0
      %732 = vmatprep.subr.bf16.mxu0 0
      %733 = vmatpush1.bf16.msra.mxu0 0
      %734 = vmatprep.subr.bf16.mxu0 0
      %735 = vmatpush1.bf16.msra.mxu0 0
      %736 = vmatprep.subr.bf16.mxu0 0
      %737 = vmatpush1.bf16.msra.mxu0 0
      %738 = vmatprep.subr.bf16.mxu0 0
      %739 = vmatpush1.bf16.msra.mxu0 0
      %740 = vmatprep.subr.bf16.mxu0 0
      %741 = vmatpush1.bf16.msra.mxu0 0
      %742 = vmatprep.subr.bf16.mxu0 0
      %743 = vmatpush1.bf16.msra.mxu0 0
      %744 = vmatprep.mubr.bf16.mxu0 %v700
      %745 = vmatmul.mubr.bf16.gmra.mrb[0].mxu0 %v583
      %v746 = vpop.f32.mrb[0].mxu0
      %v747 = vadd.f32 0.0, %v746
      %v748 = vpop.f32.mrb[0].mxu0
      %v749 = vadd.f32 0.0, %v748
      %v750 = vpop.f32.mrb[0].mxu0
      %v751 = vadd.f32 0.0, %v750
      %v752 = vpop.f32.mrb[0].mxu0
      %v753 = vadd.f32 0.0, %v752
      %754 = vmatprep.mubr.bf16.mxu0 %v703
      %755 = vmatmul.mubr.bf16.gmra.mrb[0].mxu0 %v603
      %v756 = vpop.f32.mrb[0].mxu0
      %v757 = vadd.f32 0.0, %v756
      %v758 = vpop.f32.mrb[0].mxu0
      %v759 = vadd.f32 0.0, %v758
      %v760 = vpop.f32.mrb[0].mxu0
      %v761 = vadd.f32 0.0, %v760
      %v762 = vpop.f32.mrb[0].mxu0
      %v763 = vadd.f32 0.0, %v762
      %764 = vdwg.mxu0
      %v782 = vunpack.c.l.b16 %v528
      %v783 = vunpack.c.h.b16 %v528
      %v784 = vunpack.c.l.b16 %v529
      %v785 = vunpack.c.h.b16 %v529
      %v786 = vunpack.c.l.b16 %v530
      %v787 = vunpack.c.h.b16 %v530
      %v788 = vunpack.c.l.b16 %v531
      %v789 = vunpack.c.h.b16 %v531
      %v790 = vunpack.c.l.b16 %v532
      %v791 = vunpack.c.h.b16 %v532
      %v792 = vunpack.c.l.b16 %v533
      %v793 = vunpack.c.h.b16 %v533
      %v794 = vunpack.c.l.b16 %v534
      %v795 = vunpack.c.h.b16 %v534
      %v796 = vunpack.c.l.b16 %v535
      %v797 = vunpack.c.h.b16 %v535
      %v798 = vunpack.c.l.b16 %v536
      %v799 = vunpack.c.h.b16 %v536
      %v800 = vunpack.c.l.b16 %v537
      %v801 = vunpack.c.h.b16 %v537
      %v802 = vunpack.c.l.b16 %v538
      %v803 = vunpack.c.h.b16 %v538
      %v804 = vunpack.c.l.b16 %v539
      %v805 = vunpack.c.h.b16 %v539
      %v806 = vunpack.c.l.b16 %v540
      %v807 = vunpack.c.h.b16 %v540
      %v808 = vunpack.c.l.b16 %v541
      %v809 = vunpack.c.h.b16 %v541
      %v810 = vunpack.c.l.b16 %v542
      %v811 = vunpack.c.h.b16 %v542
      %v812 = vunpack.c.l.b16 %v543
      %v813 = vunpack.c.h.b16 %v543
      %v814 = vunpack.c.l.b16 %v544
      %v815 = vunpack.c.h.b16 %v544
      %v816 = vpack.c.b16 %v784, %v782
      %v817 = vpack.c.b16 %v785, %v783
      %v818 = vpack.c.b16 %v788, %v786
      %v819 = vpack.c.b16 %v789, %v787
      %v820 = vpack.c.b16 %v792, %v790
      %v821 = vpack.c.b16 %v793, %v791
      %v822 = vpack.c.b16 %v796, %v794
      %v823 = vpack.c.b16 %v797, %v795
      %v824 = vpack.c.b16 %v800, %v798
      %v825 = vpack.c.b16 %v801, %v799
      %v826 = vpack.c.b16 %v804, %v802
      %v827 = vpack.c.b16 %v805, %v803
      %v828 = vpack.c.b16 %v808, %v806
      %v829 = vpack.c.b16 %v809, %v807
      %v830 = vpack.c.b16 %v812, %v810
      %v831 = vpack.c.b16 %v813, %v811
      %v832 = vpack.c.b16 %v814, %v814
      %v833 = vpack.c.b16 %v815, %v815
      %v851 = vsel %vm507, %v525, 0
      %v853 = vsel %vm507, %v527, 0
      %v856 = vsel %vm705, %v832, 0
      %v859 = vsel %vm705, %v833, 0
      %861 = vmatprep.subr.bf16.mxu0 %v817
      %862 = vmatpush1.bf16.msra.mxu0 %v816
      %863 = vmatprep.subr.bf16.mxu0 %v819
      %864 = vmatpush1.bf16.msra.mxu0 %v818
      %865 = vmatprep.subr.bf16.mxu0 %v821
      %866 = vmatpush1.bf16.msra.mxu0 %v820
      %867 = vmatprep.subr.bf16.mxu0 %v823
      %868 = vmatpush1.bf16.msra.mxu0 %v822
      %869 = vmatprep.subr.bf16.mxu0 %v825
      %870 = vmatpush1.bf16.msra.mxu0 %v824
      %871 = vmatprep.subr.bf16.mxu0 %v827
      %872 = vmatpush1.bf16.msra.mxu0 %v826
      %873 = vmatprep.subr.bf16.mxu0 %v829
      %874 = vmatpush1.bf16.msra.mxu0 %v828
      %875 = vmatprep.subr.bf16.mxu0 %v831
      %876 = vmatpush1.bf16.msra.mxu0 %v830
      %877 = vmatprep.subr.bf16.mxu0 %v859
      %878 = vmatpush1.bf16.msra.mxu0 %v856
      %879 = vmatprep.subr.bf16.mxu0 0
      %880 = vmatpush1.bf16.msra.mxu0 0
      %881 = vmatprep.subr.bf16.mxu0 0
      %882 = vmatpush1.bf16.msra.mxu0 0
      %883 = vmatprep.subr.bf16.mxu0 0
      %884 = vmatpush1.bf16.msra.mxu0 0
      %885 = vmatprep.subr.bf16.mxu0 0
      %886 = vmatpush1.bf16.msra.mxu0 0
      %887 = vmatprep.subr.bf16.mxu0 0
      %888 = vmatpush1.bf16.msra.mxu0 0
      %889 = vmatprep.subr.bf16.mxu0 0
      %890 = vmatpush1.bf16.msra.mxu0 0
      %891 = vmatprep.subr.bf16.mxu0 0
      %892 = vmatpush1.bf16.msra.mxu0 0
      %893 = vmatprep.mubr.bf16.mxu0 %v851
      %894 = vmatmul.mubr.bf16.gmra.mrb[0].mxu0 %v524
      %v895 = vpop.f32.mrb[0].mxu0
      %v896 = vadd.f32 %v747, %v895
      %v897 = vpop.f32.mrb[0].mxu0
      %v898 = vadd.f32 %v749, %v897
      %v899 = vpop.f32.mrb[0].mxu0
      %v900 = vadd.f32 %v751, %v899
      %v901 = vpop.f32.mrb[0].mxu0
      %v902 = vadd.f32 %v753, %v901
      %903 = vmatprep.mubr.bf16.mxu0 %v853
      %904 = vmatmul.mubr.bf16.gmra.mrb[0].mxu0 %v526
      %v905 = vpop.f32.mrb[0].mxu0
      %v906 = vadd.f32 %v757, %v905
      %v907 = vpop.f32.mrb[0].mxu0
      %v908 = vadd.f32 %v759, %v907
      %v909 = vpop.f32.mrb[0].mxu0
      %v910 = vadd.f32 %v761, %v909
      %v911 = vpop.f32.mrb[0].mxu0
      %v912 = vadd.f32 %v763, %v911
      %913 = vdwg.mxu0
      %v914 = vld [vmem:[#allocation2] sm:$0xfc]
      %v915 = vld [vmem:[#allocation2 + $0x8] sm:$0xfc]
      %v916 = vld [vmem:[#allocation2 + $0x40] sm:$0x3]
      %v917 = vld [vmem:[#allocation2 + $0x48] sm:$0x3]
      %v918 = vpack.c.bf16 %v518, %v914
      %v919 = vpack.c.bf16 %v519, %v915
      %v920 = vpack.c.bf16 %v916, %v916
      %v921 = vpack.c.bf16 %v917, %v917
      %s922 = scalar_lea.vmem %s3, 272
      %v923 = vld [vmem:[%s922] sm:$0xff]
      %v924 = vld [vmem:[%s922 + $0x8] sm:$0xff]
      %v925 = vld [vmem:[%s922 + $0x10] sm:$0xff]
      %v926 = vld [vmem:[%s922 + $0x18] sm:$0xff]
      %v927 = vld [vmem:[%s922 + $0x20] sm:$0xff]
      %v928 = vld [vmem:[%s922 + $0x28] sm:$0xff]
      %v929 = vld [vmem:[%s922 + $0x30] sm:$0xff]
      %v930 = vld [vmem:[%s922 + $0x38] sm:$0xff]
      %v931 = vld [vmem:[%s922 + $0x40] sm:$0xff]
      %v932 = vld [vmem:[%s922 + $0x48] sm:$0xff]
      %v933 = vld [vmem:[%s922 + $0x50] sm:$0xff]
      %v934 = vld [vmem:[%s922 + $0x58] sm:$0xff]
      %v935 = vld [vmem:[%s922 + $0x60] sm:$0xff]
      %v936 = vld [vmem:[%s922 + $0x68] sm:$0xff]
      %v937 = vld [vmem:[%s922 + $0x70] sm:$0xff]
      %v938 = vld [vmem:[%s922 + $0x78] sm:$0xff]
      %v939 = vld [vmem:[%s922 + $0x80] sm:$0xff]
      %vm946 = vcmask 1046528
      %v947 = vrot.slane %v918, 1
      %v948 = vrot.slane %v526, 1
      %v949 = vsel %vm946, %v947, %v948
      %v950 = vrot.slane %v919, 1
      %v951 = vrot.slane %v527, 1
      %v952 = vsel %vm946, %v950, %v951
      %v953 = vrot.slane %v920, 1
      %v954 = vsel %vm946, %v948, %v953
      %v955 = vrot.slane %v921, 1
      %v956 = vsel %vm946, %v951, %v955
      %v976 = vunpack.c.l.b16 %v923
      %v977 = vunpack.c.h.b16 %v923
      %v978 = vunpack.c.l.b16 %v924
      %v979 = vunpack.c.h.b16 %v924
      %v980 = vunpack.c.l.b16 %v925
      %v981 = vunpack.c.h.b16 %v925
      %v982 = vunpack.c.l.b16 %v926
      %v983 = vunpack.c.h.b16 %v926
      %v984 = vunpack.c.l.b16 %v927
      %v985 = vunpack.c.h.b16 %v927
      %v986 = vunpack.c.l.b16 %v928
      %v987 = vunpack.c.h.b16 %v928
      %v988 = vunpack.c.l.b16 %v929
      %v989 = vunpack.c.h.b16 %v929
      %v990 = vunpack.c.l.b16 %v930
      %v991 = vunpack.c.h.b16 %v930
      %v992 = vunpack.c.l.b16 %v931
      %v993 = vunpack.c.h.b16 %v931
      %v994 = vunpack.c.l.b16 %v932
      %v995 = vunpack.c.h.b16 %v932
      %v996 = vunpack.c.l.b16 %v933
      %v997 = vunpack.c.h.b16 %v933
      %v998 = vunpack.c.l.b16 %v934
      %v999 = vunpack.c.h.b16 %v934
      %v1000 = vunpack.c.l.b16 %v935
      %v1001 = vunpack.c.h.b16 %v935
      %v1002 = vunpack.c.l.b16 %v936
      %v1003 = vunpack.c.h.b16 %v936
      %v1004 = vunpack.c.l.b16 %v937
      %v1005 = vunpack.c.h.b16 %v937
      %v1006 = vunpack.c.l.b16 %v938
      %v1007 = vunpack.c.h.b16 %v938
      %v1008 = vunpack.c.l.b16 %v939
      %v1009 = vunpack.c.h.b16 %v939
      %v1010 = vpack.c.b16 %v978, %v976
      %v1011 = vpack.c.b16 %v979, %v977
      %v1012 = vpack.c.b16 %v982, %v980
      %v1013 = vpack.c.b16 %v983, %v981
      %v1014 = vpack.c.b16 %v986, %v984
      %v1015 = vpack.c.b16 %v987, %v985
      %v1016 = vpack.c.b16 %v990, %v988
      %v1017 = vpack.c.b16 %v991, %v989
      %v1018 = vpack.c.b16 %v994, %v992
      %v1019 = vpack.c.b16 %v995, %v993
      %v1020 = vpack.c.b16 %v998, %v996
      %v1021 = vpack.c.b16 %v999, %v997
      %v1022 = vpack.c.b16 %v1002, %v1000
      %v1023 = vpack.c.b16 %v1003, %v1001
      %v1024 = vpack.c.b16 %v1006, %v1004
      %v1025 = vpack.c.b16 %v1007, %v1005
      %v1026 = vpack.c.b16 %v1008, %v1008
      %v1027 = vpack.c.b16 %v1009, %v1009
      %v1045 = vsel %vm507, %v952, 0
      %v1048 = vsel %vm507, %v956, 0
      %v1051 = vsel %vm705, %v1026, 0
      %v1054 = vsel %vm705, %v1027, 0
      %1056 = vmatprep.subr.bf16.mxu0 %v1011
      %1057 = vmatpush1.bf16.msra.mxu0 %v1010
      %1058 = vmatprep.subr.bf16.mxu0 %v1013
      %1059 = vmatpush1.bf16.msra.mxu0 %v1012
      %1060 = vmatprep.subr.bf16.mxu0 %v1015
      %1061 = vmatpush1.bf16.msra.mxu0 %v1014
      %1062 = vmatprep.subr.bf16.mxu0 %v1017
      %1063 = vmatpush1.bf16.msra.mxu0 %v1016
      %1064 = vmatprep.subr.bf16.mxu0 %v1019
      %1065 = vmatpush1.bf16.msra.mxu0 %v1018
      %1066 = vmatprep.subr.bf16.mxu0 %v1021
      %1067 = vmatpush1.bf16.msra.mxu0 %v1020
      %1068 = vmatprep.subr.bf16.mxu0 %v1023
      %1069 = vmatpush1.bf16.msra.mxu0 %v1022
      %1070 = vmatprep.subr.bf16.mxu0 %v1025
      %1071 = vmatpush1.bf16.msra.mxu0 %v1024
      %1072 = vmatprep.subr.bf16.mxu0 %v1054
      %1073 = vmatpush1.bf16.msra.mxu0 %v1051
      %1074 = vmatprep.subr.bf16.mxu0 0
      %1075 = vmatpush1.bf16.msra.mxu0 0
      %1076 = vmatprep.subr.bf16.mxu0 0
      %1077 = vmatpush1.bf16.msra.mxu0 0
      %1078 = vmatprep.subr.bf16.mxu0 0
      %1079 = vmatpush1.bf16.msra.mxu0 0
      %1080 = vmatprep.subr.bf16.mxu0 0
      %1081 = vmatpush1.bf16.msra.mxu0 0
      %1082 = vmatprep.subr.bf16.mxu0 0
      %1083 = vmatpush1.bf16.msra.mxu0 0
      %1084 = vmatprep.subr.bf16.mxu0 0
      %1085 = vmatpush1.bf16.msra.mxu0 0
      %1086 = vmatprep.subr.bf16.mxu0 0
      %1087 = vmatpush1.bf16.msra.mxu0 0
      %1088 = vmatprep.mubr.bf16.mxu0 %v1045
      %1089 = vmatmul.mubr.bf16.gmra.mrb[0].mxu0 %v949
      %v1090 = vpop.f32.mrb[0].mxu0
      %v1091 = vadd.f32 0.0, %v1090
      %v1092 = vpop.f32.mrb[0].mxu0
      %v1093 = vadd.f32 0.0, %v1092
      %v1094 = vpop.f32.mrb[0].mxu0
      %v1095 = vadd.f32 0.0, %v1094
      %v1096 = vpop.f32.mrb[0].mxu0
      %v1097 = vadd.f32 0.0, %v1096
      %1098 = vmatprep.mubr.bf16.mxu0 %v1048
      %1099 = vmatmul.mubr.bf16.gmra.mrb[0].mxu0 %v954
      %v1100 = vpop.f32.mrb[0].mxu0
      %v1101 = vadd.f32 0.0, %v1100
      %v1102 = vpop.f32.mrb[0].mxu0
      %v1103 = vadd.f32 0.0, %v1102
      %v1104 = vpop.f32.mrb[0].mxu0
      %v1105 = vadd.f32 0.0, %v1104
      %v1106 = vpop.f32.mrb[0].mxu0
      %v1107 = vadd.f32 0.0, %v1106
      %1108 = vdwg.mxu0
      %v1109 = vadd.f32 %v896, %v1091
      %v1110 = vadd.f32 %v898, %v1093
      %v1111 = vadd.f32 %v900, %v1095
      %v1112 = vadd.f32 %v902, %v1097
      %v1113 = vadd.f32 %v906, %v1101
      %v1114 = vadd.f32 %v908, %v1103
      %v1115 = vadd.f32 %v910, %v1105
      %v1116 = vadd.f32 %v912, %v1107
      %1117 = vst [vmem:[%s232] sm:$0xff] %v1109
      %1118 = vst [vmem:[%s232 + $0x8] sm:$0xff] %v1110
      %1119 = vst [vmem:[%s232 + $0x10] sm:$0xff] %v1111
      %1120 = vst [vmem:[%s232 + $0x18] sm:$0xff] %v1112
      %1121 = vst [vmem:[%s232 + $0x20] sm:$0xff] %v1113
      %1122 = vst [vmem:[%s232 + $0x28] sm:$0xff] %v1114
      %1123 = vst [vmem:[%s232 + $0x30] sm:$0xff] %v1115
      %1124 = vst [vmem:[%s232 + $0x38] sm:$0xff] %v1116
      %v1125 = vadd.f32 %v1109, %v1111
      %v1126 = vadd.f32 %v1125, %v1113
      %v1127 = vadd.f32 %v1126, %v1115
      %v1128 = vrot.slane %v1127, 4
      %v1129 = vadd.f32 %v1127, %v1128
      %v1130 = vrot.slane %v1129, 2
      %v1131 = vadd.f32 %v1129, %v1130
      %v1132 = vrot.slane %v1131, 1
      %v1133 = vadd.f32 %v1131, %v1132
      %v1134 = vadd.f32 %v1110, %v1112
      %v1135 = vadd.f32 %v1134, %v1114
      %v1136 = vadd.f32 %v1135, %v1116
      %v1137 = vrot.slane %v1136, 4
      %v1138 = vadd.f32 %v1136, %v1137
      %v1139 = vrot.slane %v1138, 2
      %v1140 = vadd.f32 %v1138, %v1139
      %v1141 = vrot.slane %v1140, 1
      %v1142 = vadd.f32 %v1140, %v1141
      %v1143 = vmul.f32 %v1109, %v1109
      %v1144 = vmul.f32 %v1110, %v1110
      %v1145 = vmul.f32 %v1111, %v1111
      %v1146 = vmul.f32 %v1112, %v1112
      %v1147 = vmul.f32 %v1113, %v1113
      %v1148 = vmul.f32 %v1114, %v1114
      %v1149 = vmul.f32 %v1115, %v1115
      %v1150 = vmul.f32 %v1116, %v1116
      %v1151 = vadd.f32 %v1143, %v1145
      %v1152 = vadd.f32 %v1151, %v1147
      %v1153 = vadd.f32 %v1152, %v1149
      %v1154 = vrot.slane %v1153, 4
      %v1155 = vadd.f32 %v1153, %v1154
      %v1156 = vrot.slane %v1155, 2
      %v1157 = vadd.f32 %v1155, %v1156
      %v1158 = vrot.slane %v1157, 1
      %v1159 = vadd.f32 %v1157, %v1158
      %v1160 = vadd.f32 %v1144, %v1146
      %v1161 = vadd.f32 %v1160, %v1148
      %v1162 = vadd.f32 %v1161, %v1150
      %v1163 = vrot.slane %v1162, 4
      %v1164 = vadd.f32 %v1162, %v1163
      %v1165 = vrot.slane %v1164, 2
      %v1166 = vadd.f32 %v1164, %v1165
      %v1167 = vrot.slane %v1166, 1
      %v1168 = vadd.f32 %v1166, %v1167
      %v1169 = vsel %vm478, %v1133, %v1159
      %v1170 = vsel %vm478, %v1142, %v1168
      %v1173 = vcombine.low %v1169, %v1170
      %v1175 = vunpack.c.l.s4 1983009808
      %v1176 = vunpack.c.0.s8 %v1175
      %v1177 = vlaneseq
      %v1178 = vshrl.u32 %v1177, 7
      %v1179 = vsub.s32 %v1176, %v1178
      %v1180 = vrot.slane %v1173, %v1179
      %1182 = vst [vmem:[%s237] sm:$0xf] %v1180
      %p1183 = scmp.lt.s32.totalorder %s17, 1
      %s1184 = scalar_select %p1183, %s17, 1
      %s1185 = smul.addr %s1184, 8
      %s1186 = smul.addr %s1185, 8
      %s1187 = scalar_lea.vmem %s4, %s1186
      %p1188 = scmp.lt.s32.totalorder %s17, 1
      %s1189 = scalar_select %p1188, %s17, 1
      %s1190 = smul.addr %s1189, 2
      %s1191 = smul.addr %s1190, 2
      %s1192 = scalar_lea.vmem %s5, %s1191
      // Predicated region
      $region37: #{up_conv_forward.2} parent=35 // pred_check
        %p1193 = pneg %p124
      $region38: #{up_conv_forward.2} parent=35 // pred_check_branch
        %1195 = sbr.rel (%p1193) target = $region40
      $region39: #{up_conv_forward.2} parent=35 // pred_region
        _
      $region40: #{up_conv_forward.2} parent=35 // pred_fallthru
        _
      // Predicated region
      $region41: #{up_conv_forward.2} parent=35 // pred_check
        %p1196 = pneg %p150
      $region42: #{up_conv_forward.2} parent=35 // pred_check_branch
        %1198 = sbr.rel (%p1196) target = $region44
      $region43: #{up_conv_forward.2} parent=35 // pred_region
        _
      $region44: #{up_conv_forward.2} parent=35 // pred_fallthru
        _
    $region36: #{up_conv_forward.2} parent=5 // pred_fallthru
      _
    %p1199 = scmp.le.s32.totalorder 2, %s12
    // Predicated region
    $region45: #{up_conv_forward.2} parent=5 // pred_check
      %p1200 = pneg %p1199
    $region46: #{up_conv_forward.2} parent=5 // pred_check_branch
      %1202 = sbr.rel (%p1200) target = $region48
    $region47: #{up_conv_forward.2} parent=5 // pred_region
      %s1203 = ssub.s32 %s12, 2
      // Predicated region
      $region49: #{up_conv_forward.2} parent=47 // pred_check
        %p1204 = pneg %p130
      $region50: #{up_conv_forward.2} parent=47 // pred_check_branch
        %1206 = sbr.rel (%p1204) target = $region52
      $region51: #{up_conv_forward.2} parent=47 // pred_region
        %p1207 = scmp.lt.s32.totalorder %s18, 1
        %s1208 = scalar_select %p1207, %s18, 1
        %s1209 = smul.addr %s1208, 8
        %s1210 = smul.addr %s1209, 8
        %s1211 = scalar_lea.vmem %s4, %s1210
      $region52: #{up_conv_forward.2} parent=47 // pred_fallthru
        _
      // Predicated region
      $region53: #{up_conv_forward.2} parent=47 // pred_check
        %p1212 = pneg %p156
      $region54: #{up_conv_forward.2} parent=47 // pred_check_branch
        %1214 = sbr.rel (%p1212) target = $region56
      $region55: #{up_conv_forward.2} parent=47 // pred_region
        %p1215 = scmp.lt.s32.totalorder %s18, 1
        %s1216 = scalar_select %p1215, %s18, 1
        %s1217 = smul.addr %s1216, 2
        %s1218 = smul.addr %s1217, 2
        %s1219 = scalar_lea.vmem %s5, %s1218
      $region56: #{up_conv_forward.2} parent=47 // pred_fallthru
        _
    $region48: #{up_conv_forward.2} parent=5 // pred_fallthru
      _
  $region6: #{up_conv_forward.2} parent=0 // loop_footer
    %s16 = sadd.s32 1, %s12
  $region7: #{up_conv_forward.2} parent=0 // loop_footer_branch
    %11 = sbr.rel target = $region3
  $region8: #{up_conv_forward.2} parent=0 // loop_exit
    _

// kernel: up_conv_forward.3
$region0: #{up_conv_forward.3}
  #allocation0 [shape = 'u32[]', space=smem, size = 0x4, offset = 0x4, fixed_abs, tag = 'smem constant byte address 0x4 - core index']
  #allocation1 [shape = 'u32[144,128]{1,0:T(1,128)}', space=vmem, size = 0x12000, scoped, tag = 'internal scratch']
  %s0 = inlined_call_operand.vmem [shape: f32[2,32,256], index: 0, kind: input, shape index: {}, may-alias: {0,3}]
  %s1 = inlined_call_operand.vmem [shape: f32[1,256], index: 1, kind: input, shape index: {}]
  %s2 = inlined_call_operand.vmem [shape: f32[1,256], index: 2, kind: input, shape index: {}]
  %s3 = inlined_call_operand.vmem [shape: f32[2,32,256], index: 3, kind: output, shape index: {}, may-alias: {0,3}]
  %s4 = sld [smem:[#allocation0]]
  $region45: #{up_conv_forward.3} parent=0
    _
  %s6 = ssub.s32 1, %s4
  %s7 = scalar_select 0, %s6, %s4
  loop: start=0, step=1, limit=4
  $region2: #{up_conv_forward.3} parent=0 // loop_pre_header
    _
  $region3: #{up_conv_forward.3} parent=0 // loop_header
    %s9 = sphi 0, %s13
    %p10 = scmp.ge.s32.totalorder %s9, 4
    %s19 = sphi 0, %s21
    %s22 = sphi 0, %s19
    %s23 = sphi 0, %s22
    %s39 = sphi 0, %s23
    %s43 = sphi 0, %s43
    %s45 = sphi 0, %s43
    %s46 = sphi 0, %s45
    %s60 = sphi 0, %s46
    %s64 = sphi 0, %s64
    %s66 = sphi 0, %s64
    %s67 = sphi 0, %s66
    %s81 = sphi 0, %s67
    %s87 = sphi 0, %s89
    %s90 = sphi 0, %s87
    %s91 = sphi 0, %s90
    %s107 = sphi 0, %s91
  $region4: #{up_conv_forward.3} parent=0 // loop_header_branch
    %12 = sbr.rel (%p10) target = $region8
  $region5: #{up_conv_forward.3} parent=0 // loop_body
    %s14 = ssub.s32 %s9, 1
    %s15 = ssub.s32 %s9, 2
    %s16 = sadd.s32 %s9, 1
    %s17 = ssub.s32 %s9, %s16
    %p18 = scmp.eq.s32.totalorder %s17, 0
    %s20 = sadd.s32 %s19, 1
    %s21 = scalar_select %p18, %s19, %s20
    %p24 = pneg %p18
    %p25 = scmp.eq.s32.totalorder %s9, 1
    %p26 = por %p24, %p25
    %p27 = scmp.ne.s32.totalorder %s19, %s22
    %p28 = scmp.eq.s32.totalorder %s9, 0
    %p29 = por %p27, %p28
    %p30 = scmp.ne.s32.totalorder %s19, %s22
    %p31 = scmp.eq.s32.totalorder %s14, 1
    %p32 = por %p30, %p31
    %p33 = scmp.ne.s32.totalorder %s22, %s23
    %p34 = scmp.eq.s32.totalorder %s14, 0
    %p35 = por %p33, %p34
    %p36 = scmp.ne.s32.totalorder %s22, %s23
    %p37 = scmp.eq.s32.totalorder %s15, 1
    %p38 = por %p36, %p37
    %p40 = scmp.ne.s32.totalorder %s23, %s39
    %p41 = scmp.eq.s32.totalorder %s15, 0
    %p42 = por %p40, %p41
    %s44 = sadd.s32 %s43, 1
    %p47 = scmp.eq.s32.totalorder %s9, 1
    %p48 = scmp.ne.s32.totalorder %s43, %s45
    %p49 = scmp.eq.s32.totalorder %s9, 0
    %p50 = por %p48, %p49
    %p51 = scmp.ne.s32.totalorder %s43, %s45
    %p52 = scmp.eq.s32.totalorder %s14, 1
    %p53 = por %p51, %p52
    %p54 = scmp.ne.s32.totalorder %s45, %s46
    %p55 = scmp.eq.s32.totalorder %s14, 0
    %p56 = por %p54, %p55
    %p57 = scmp.ne.s32.totalorder %s45, %s46
    %p58 = scmp.eq.s32.totalorder %s15, 1
    %p59 = por %p57, %p58
    %p61 = scmp.ne.s32.totalorder %s46, %s60
    %p62 = scmp.eq.s32.totalorder %s15, 0
    %p63 = por %p61, %p62
    %s65 = sadd.s32 %s64, 1
    %p68 = scmp.eq.s32.totalorder %s9, 1
    %p69 = scmp.ne.s32.totalorder %s64, %s66
    %p70 = scmp.eq.s32.totalorder %s9, 0
    %p71 = por %p69, %p70
    %p72 = scmp.ne.s32.totalorder %s64, %s66
    %p73 = scmp.eq.s32.totalorder %s14, 1
    %p74 = por %p72, %p73
    %p75 = scmp.ne.s32.totalorder %s66, %s67
    %p76 = scmp.eq.s32.totalorder %s14, 0
    %p77 = por %p75, %p76
    %p78 = scmp.ne.s32.totalorder %s66, %s67
    %p79 = scmp.eq.s32.totalorder %s15, 1
    %p80 = por %p78, %p79
    %p82 = scmp.ne.s32.totalorder %s67, %s81
    %p83 = scmp.eq.s32.totalorder %s15, 0
    %p84 = por %p82, %p83
    %s85 = ssub.s32 %s9, %s16
    %p86 = scmp.eq.s32.totalorder %s85, 0
    %s88 = sadd.s32 %s87, 1
    %s89 = scalar_select %p86, %s87, %s88
    %p92 = pneg %p86
    %p93 = scmp.eq.s32.totalorder %s9, 1
    %p94 = por %p92, %p93
    %p95 = scmp.ne.s32.totalorder %s87, %s90
    %p96 = scmp.eq.s32.totalorder %s9, 0
    %p97 = por %p95, %p96
    %p98 = scmp.ne.s32.totalorder %s87, %s90
    %p99 = scmp.eq.s32.totalorder %s14, 1
    %p100 = por %p98, %p99
    %p101 = scmp.ne.s32.totalorder %s90, %s91
    %p102 = scmp.eq.s32.totalorder %s14, 0
    %p103 = por %p101, %p102
    %p104 = scmp.ne.s32.totalorder %s90, %s91
    %p105 = scmp.eq.s32.totalorder %s15, 1
    %p106 = por %p104, %p105
    %p108 = scmp.ne.s32.totalorder %s91, %s107
    %p109 = scmp.eq.s32.totalorder %s15, 0
    %p110 = por %p108, %p109
    %p111 = scmp.le.s32.totalorder 1, %s9
    %p112 = scmp.lt.s32.totalorder %s9, 3
    %p113 = pnand %p111, %p112
    %p114 = pneg %p113
    // Predicated region
    $region9: #{up_conv_forward.3} parent=5 // pred_check
      _
    $region10: #{up_conv_forward.3} parent=5 // pred_check_branch
      %116 = sbr.rel (%p113) target = $region12
    $region11: #{up_conv_forward.3} parent=5 // pred_region
      %s117 = ssub.s32 %s9, 1
      // Predicated region
      $region13: #{up_conv_forward.3} parent=11 // pred_check
        %p118 = pneg %p56
      $region14: #{up_conv_forward.3} parent=11 // pred_check_branch
        %120 = sbr.rel (%p118) target = $region16
      $region15: #{up_conv_forward.3} parent=11 // pred_region
        _
      $region16: #{up_conv_forward.3} parent=11 // pred_fallthru
        _
      // Predicated region
      $region17: #{up_conv_forward.3} parent=11 // pred_check
        %p121 = pneg %p77
      $region18: #{up_conv_forward.3} parent=11 // pred_check_branch
        %123 = sbr.rel (%p121) target = $region20
      $region19: #{up_conv_forward.3} parent=11 // pred_region
        _
      $region20: #{up_conv_forward.3} parent=11 // pred_fallthru
        _
    $region12: #{up_conv_forward.3} parent=5 // pred_fallthru
      _
    %p124 = scmp.lt.s32.totalorder %s9, 2
    // Predicated region
    $region21: #{up_conv_forward.3} parent=5 // pred_check
      %p125 = pneg %p124
    $region22: #{up_conv_forward.3} parent=5 // pred_check_branch
      %127 = sbr.rel (%p125) target = $region24
    $region23: #{up_conv_forward.3} parent=5 // pred_region
      // Predicated region
      $region25: #{up_conv_forward.3} parent=23 // pred_check
        %p128 = pneg %p29
      $region26: #{up_conv_forward.3} parent=23 // pred_check_branch
        %130 = sbr.rel (%p128) target = $region28
      $region27: #{up_conv_forward.3} parent=23 // pred_region
        %p131 = scmp.lt.s32.totalorder %s9, 1
        %s132 = scalar_select %p131, %s9, 1
        %s133 = smul.addr %s132, 8
        %s134 = smul.addr %s133, 8
        %s135 = scalar_lea.vmem %s0, %s134
      $region28: #{up_conv_forward.3} parent=23 // pred_fallthru
        _
    $region24: #{up_conv_forward.3} parent=5 // pred_fallthru
      _
    %p136 = scmp.le.s32.totalorder 1, %s9
    %p137 = scmp.lt.s32.totalorder %s9, 3
    %p138 = pnand %p136, %p137
    %p139 = pneg %p138
    // Predicated region
    $region29: #{up_conv_forward.3} parent=5 // pred_check
      _
    $region30: #{up_conv_forward.3} parent=5 // pred_check_branch
      %141 = sbr.rel (%p138) target = $region32
    $region31: #{up_conv_forward.3} parent=5 // pred_region
      %s142 = ssub.s32 %s9, 1
      %p143 = scmp.lt.s32.totalorder %s14, 1
      %s144 = scalar_select %p143, %s14, 1
      %s145 = smul.addr %s144, 8
      %s146 = smul.addr %s145, 8
      %s147 = scalar_lea.vmem %s0, %s146
      %p148 = pneg %p35
      %p149 = pneg %p32
      %p150 = pneg %p56
      %p151 = pneg %p53
      %p152 = pneg %p77
      %p153 = pneg %p74
      %p154 = pneg %p103
      %p155 = pneg %p100
      %p156 = scmp.lt.s32.totalorder %s14, 1
      %s157 = scalar_select %p156, %s14, 1
      %s158 = smul.addr %s157, 8
      %s159 = smul.addr %s158, 8
      %s160 = scalar_lea.vmem %s3, %s159
      %p161 = scmp.lt.s32.totalorder %s14, 1
      %s162 = scalar_select %p161, %s14, 1
      %s163 = smul.addr %s162, 8
      %s164 = smul.addr %s163, 8
      %s165 = scalar_lea.vmem %s0, %s164
      %p166 = scmp.lt.s32.totalorder %s14, 1
      %s167 = scalar_select %p166, %s14, 1
      %s168 = smul.addr %s167, 8
      %s169 = smul.addr %s168, 8
      %s170 = scalar_lea.vmem %s3, %s169
      %v171 = vld [vmem:[%s165] sm:$0xff]
      %v172 = vld [vmem:[%s165 + $0x8] sm:$0xff]
      %v173 = vld [vmem:[%s165 + $0x10] sm:$0xff]
      %v174 = vld [vmem:[%s165 + $0x18] sm:$0xff]
      %v175 = vld [vmem:[%s165 + $0x20] sm:$0xff]
      %v176 = vld [vmem:[%s165 + $0x28] sm:$0xff]
      %v177 = vld [vmem:[%s165 + $0x30] sm:$0xff]
      %v178 = vld [vmem:[%s165 + $0x38] sm:$0xff]
      %v179 = vld [vmem:[%s1] sm:$0x3]
      %v181 = vlaneseq
      %v182 = vshrl.u32 %v181, 7
      %v183 = vsub.s32 0, %v182
      %v184 = vrot.slane %v179, %v183
      %v185 = vlaneseq
      %v186 = vshrl.u32 %v185, 7
      %v187 = vsub.s32 1, %v186
      %v188 = vrot.slane %v179, %v187
      %v191 = vmul.f32 %v171, %v184
      %v192 = vmul.f32 %v172, %v188
      %v193 = vmul.f32 %v173, %v184
      %v194 = vmul.f32 %v174, %v188
      %v195 = vmul.f32 %v175, %v184
      %v196 = vmul.f32 %v176, %v188
      %v197 = vmul.f32 %v177, %v184
      %v198 = vmul.f32 %v178, %v188
      %v199 = vld [vmem:[%s2] sm:$0x3]
      %v201 = vlaneseq
      %v202 = vshrl.u32 %v201, 7
      %v203 = vsub.s32 0, %v202
      %v204 = vrot.slane %v199, %v203
      %v205 = vlaneseq
      %v206 = vshrl.u32 %v205, 7
      %v207 = vsub.s32 1, %v206
      %v208 = vrot.slane %v199, %v207
      %v211 = vadd.f32 %v191, %v204
      %v212 = vadd.f32 %v192, %v208
      %v213 = vadd.f32 %v193, %v204
      %v214 = vadd.f32 %v194, %v208
      %v215 = vadd.f32 %v195, %v204
      %v216 = vadd.f32 %v196, %v208
      %v217 = vadd.f32 %v197, %v204
      %v218 = vadd.f32 %v198, %v208
      %v219 = vmax.f32 %v211, 0.0
      %v220 = vmax.f32 %v212, 0.0
      %v221 = vmax.f32 %v213, 0.0
      %v222 = vmax.f32 %v214, 0.0
      %v223 = vmax.f32 %v215, 0.0
      %v224 = vmax.f32 %v216, 0.0
      %v225 = vmax.f32 %v217, 0.0
      %v226 = vmax.f32 %v218, 0.0
      %227 = vst [vmem:[%s170] sm:$0xff] %v219
      %228 = vst [vmem:[%s170 + $0x8] sm:$0xff] %v220
      %229 = vst [vmem:[%s170 + $0x10] sm:$0xff] %v221
      %230 = vst [vmem:[%s170 + $0x18] sm:$0xff] %v222
      %231 = vst [vmem:[%s170 + $0x20] sm:$0xff] %v223
      %232 = vst [vmem:[%s170 + $0x28] sm:$0xff] %v224
      %233 = vst [vmem:[%s170 + $0x30] sm:$0xff] %v225
      %234 = vst [vmem:[%s170 + $0x38] sm:$0xff] %v226
      %p235 = scmp.lt.s32.totalorder %s14, 1
      %s236 = scalar_select %p235, %s14, 1
      %s237 = smul.addr %s236, 8
      %s238 = smul.addr %s237, 8
      %s239 = scalar_lea.vmem %s3, %s238
      // Predicated region
      $region33: #{up_conv_forward.3} parent=31 // pred_check
        %p240 = pneg %p100
      $region34: #{up_conv_forward.3} parent=31 // pred_check_branch
        %242 = sbr.rel (%p240) target = $region36
      $region35: #{up_conv_forward.3} parent=31 // pred_region
        _
      $region36: #{up_conv_forward.3} parent=31 // pred_fallthru
        _
    $region32: #{up_conv_forward.3} parent=5 // pred_fallthru
      _
    %p243 = scmp.le.s32.totalorder 2, %s9
    // Predicated region
    $region37: #{up_conv_forward.3} parent=5 // pred_check
      %p244 = pneg %p243
    $region38: #{up_conv_forward.3} parent=5 // pred_check_branch
      %246 = sbr.rel (%p244) target = $region40
    $region39: #{up_conv_forward.3} parent=5 // pred_region
      %s247 = ssub.s32 %s9, 2
      // Predicated region
      $region41: #{up_conv_forward.3} parent=39 // pred_check
        %p248 = pneg %p106
      $region42: #{up_conv_forward.3} parent=39 // pred_check_branch
        %250 = sbr.rel (%p248) target = $region44
      $region43: #{up_conv_forward.3} parent=39 // pred_region
        %p251 = scmp.lt.s32.totalorder %s15, 1
        %s252 = scalar_select %p251, %s15, 1
        %s253 = smul.addr %s252, 8
        %s254 = smul.addr %s253, 8
        %s255 = scalar_lea.vmem %s3, %s254
      $region44: #{up_conv_forward.3} parent=39 // pred_fallthru
        _
    $region40: #{up_conv_forward.3} parent=5 // pred_fallthru
      _
  $region6: #{up_conv_forward.3} parent=0 // loop_footer
    %s13 = sadd.s32 1, %s9
  $region7: #{up_conv_forward.3} parent=0 // loop_footer_branch
    %8 = sbr.rel target = $region3
  $region8: #{up_conv_forward.3} parent=0 // loop_exit
    _

</llo_original>
